<compile_context>
chip_gen: v6e
topology: v6e:2x2x1
jax: 0.10.0
libtpu: 0.0.40
codegen_flags: <defaults>
</compile_context>

<pallas_src>
import functools

import jax
import jax.numpy as jnp
from jax.experimental import pallas as pl
from jax.experimental.pallas import tpu as pltpu


# ----------------------------------------------------------------------------
# Helpers: padding / weight construction
# ----------------------------------------------------------------------------
def _round_up(x, m):
    return ((x + m - 1) // m) * m


def _pad_features(x, n_pad, dp):
    """Pad (n, d) features to (n_pad, dp) f32 with a 'ones' lane at dp-1.

    The ones lane makes A @ H_padded produce the node degree in lane dp-1
    (fused mean normalization) and lets the bias be folded into W_self.
    """
    n, d = x.shape
    hp = jnp.zeros((n_pad, dp), jnp.float32)
    hp = hp.at[:n, :d].set(x.astype(jnp.float32))
    hp = hp.at[:n, dp - 1].set(1.0)
    return hp


def _pad_adjacency(adj, n_pad):
    """Pad raw (n, n) adjacency to (n_pad, n_pad) bf16 (0/1 is exact in bf16)."""
    n = adj.shape[0]
    a = jnp.zeros((n_pad, n_pad), jnp.bfloat16)
    return a.at[:n, :n].set(adj.astype(jnp.bfloat16))


def _build_self_weight(w_self, bias, dp):
    """(dp, dp) self weight: bias folded into the ones row, ones-lane carry."""
    d_in, d_out = w_self.shape
    w = jnp.zeros((dp, dp), jnp.float32)
    w = w.at[:d_in, :d_out].set(w_self.astype(jnp.float32))
    w = w.at[dp - 1, :d_out].set(bias.astype(jnp.float32).reshape(-1))
    w = w.at[dp - 1, dp - 1].set(1.0)   # keep the ones lane alive across layers
    return w


def _build_neigh_weight(w_neigh, dp):
    """(dp, dp) neighbour weight (padded lanes / ones row stay zero)."""
    d_in, d_out = w_neigh.shape
    w = jnp.zeros((dp, dp), jnp.float32)
    w = w.at[:d_in, :d_out].set(w_neigh.astype(jnp.float32))
    return w


# ----------------------------------------------------------------------------
# Kernel 1: ALL layers fused in one pallas_call (small graphs, H fits in VMEM)
# ----------------------------------------------------------------------------
def _fused_layers_kernel(a_ref, ws_ref, wn_ref, x_ref, o_ref, h_ref, *, dp):
    """Grid axis = layer index. h_ref (VMEM scratch) carries H across layers.

    a_ref : (1, n, n)   bf16 raw adjacency for this layer (streamed per step)
    ws_ref: (1, dp, dp) f32 self weight (+ bias row, ones carry)
    wn_ref: (1, dp, dp) f32 neighbour weight
    x_ref : (n, dp)     f32 padded input features (used at layer 0 only)
    o_ref : (n, dp)     f32 final output (written at the last layer only)
    h_ref : (n, dp)     f32 resident node features
    """
    l = pl.program_id(0)
    last = pl.num_programs(0) - 1

    @pl.when(l == 0)
    def _():
        h_ref[...] = x_ref[...]

    h = h_ref[...]

    # Mean aggregation with fused normalization: the ones lane of h yields the
    # degree in lane dp-1 of agg (bf16 MXU operands, f32 accumulation).
    agg = jnp.dot(a_ref[0], h.astype(jnp.bfloat16),
                  preferred_element_type=jnp.float32)
    inv_deg = 1.0 / jnp.maximum(agg[:, dp - 1:dp], 1.0)
    mean_neigh = agg * inv_deg

    # h @ W_self + mean_neigh @ W_neigh  (bias folded into W_self's ones row).
    out = (jnp.dot(h, ws_ref[0], preferred_element_type=jnp.float32)
           + jnp.dot(mean_neigh, wn_ref[0], preferred_element_type=jnp.float32))

    @pl.when(l == last)
    def _():
        o_ref[...] = out

    @pl.when(l < last)
    def _():
        # ReLU between layers; nn.Dropout(0.5) is identity in eval mode.
        h_ref[...] = jnp.maximum(out, 0.0)


def _fused_layers_call(a_stack, ws_stack, wn_stack, x_pad, dp):
    num_layers, n, _ = a_stack.shape
    kernel = functools.partial(_fused_layers_kernel, dp=dp)
    return pl.pallas_call(
        kernel,
        out_shape=jax.ShapeDtypeStruct((n, dp), jnp.float32),
        grid_spec=pltpu.PrefetchScalarGridSpec(
            num_scalar_prefetch=0,
            grid=(num_layers,),
            in_specs=[
                pl.BlockSpec((1, n, n), lambda l: (l, 0, 0)),    # adjacency
                pl.BlockSpec((1, dp, dp), lambda l: (l, 0, 0)),  # W_self (+bias)
                pl.BlockSpec((1, dp, dp), lambda l: (l, 0, 0)),  # W_neigh
                pl.BlockSpec((n, dp), lambda l: (0, 0)),         # input feats
            ],
            out_specs=pl.BlockSpec((n, dp), lambda l: (0, 0)),
            scratch_shapes=[pltpu.VMEM((n, dp), jnp.float32)],   # resident H
        ),
        compiler_params=pltpu.CompilerParams(
            dimension_semantics=("arbitrary",),
            vmem_limit_bytes=48 * 1024 * 1024),
    )(a_stack, ws_stack, wn_stack, x_pad)


# ----------------------------------------------------------------------------
# Kernel 2: one SAGEConv layer, K-tiled over source nodes (large graphs)
# ----------------------------------------------------------------------------
def _sage_layer_tiled_kernel(a_ref, hsrc_ref, hself_ref, ws_ref, wn_ref, o_ref,
                             acc_ref, *, dp, apply_relu):
    """Grid = (dst tiles [parallel], src tiles [arbitrary]).

    a_ref    : (tile_n, tile_k) bf16 raw adjacency tile
    hsrc_ref : (tile_k, dp)     f32 source-node features (ones lane at dp-1)
    hself_ref: (tile_n, dp)     f32 destination-node (self) features
    ws_ref   : (dp, dp)         f32 self weight (+ bias row, ones carry)
    wn_ref   : (dp, dp)         f32 neighbour weight
    o_ref    : (tile_n, dp)     f32 output tile (written at last K step)
    acc_ref  : (tile_n, dp)     f32 aggregation accumulator
    """
    k = pl.program_id(1)

    @pl.when(k == 0)
    def _():
        acc_ref[...] = jnp.zeros_like(acc_ref)

    acc_ref[...] += jnp.dot(a_ref[...], hsrc_ref[...].astype(jnp.bfloat16),
                            preferred_element_type=jnp.float32)

    @pl.when(k == pl.num_programs(1) - 1)
    def _():
        agg = acc_ref[...]
        inv_deg = 1.0 / jnp.maximum(agg[:, dp - 1:dp], 1.0)
        out = (jnp.dot(hself_ref[...], ws_ref[...],
                       preferred_element_type=jnp.float32)
               + jnp.dot(agg * inv_deg, wn_ref[...],
                         preferred_element_type=jnp.float32))
        if apply_relu:
            out = jnp.maximum(out, 0.0)
        o_ref[...] = out


def sage_conv_layer_tiled(a_bf16, h_f32, w_self, w_neigh, *, apply_relu,
                          tile_n=256, tile_k=256):
    n = a_bf16.shape[0]
    dp = h_f32.shape[1]
    assert n % tile_n == 0 and n % tile_k == 0
    kernel = functools.partial(_sage_layer_tiled_kernel, dp=dp,
                               apply_relu=apply_relu)
    return pl.pallas_call(
        kernel,
        out_shape=jax.ShapeDtypeStruct((n, dp), jnp.float32),
        grid_spec=pltpu.PrefetchScalarGridSpec(
            num_scalar_prefetch=0,
            grid=(n // tile_n, n // tile_k),
            in_specs=[
                pl.BlockSpec((tile_n, tile_k), lambda i, k: (i, k)),  # A tile
                pl.BlockSpec((tile_k, dp), lambda i, k: (k, 0)),      # H (src)
                pl.BlockSpec((tile_n, dp), lambda i, k: (i, 0)),      # H (self)
                pl.BlockSpec((dp, dp), lambda i, k: (0, 0)),          # W_self
                pl.BlockSpec((dp, dp), lambda i, k: (0, 0)),          # W_neigh
            ],
            out_specs=pl.BlockSpec((tile_n, dp), lambda i, k: (i, 0)),
            scratch_shapes=[pltpu.VMEM((tile_n, dp), jnp.float32)],
        ),
        compiler_params=pltpu.CompilerParams(
            dimension_semantics=("parallel", "arbitrary")),
    )(a_bf16, h_f32, h_f32, w_self, w_neigh)


# ----------------------------------------------------------------------------
# Model wrapper (glue in plain JAX)
# ----------------------------------------------------------------------------
def init_params(key, in_feats, h_feats, num_layers):
    """Deterministic (Glorot-like) init for num_layers SAGEConv layers."""
    params = []
    dims = [in_feats] + [h_feats] * num_layers
    for l in range(num_layers):
        d_in, d_out = dims[l], dims[l + 1]
        key, k1, k2, k3 = jax.random.split(key, 4)
        scale = jnp.sqrt(2.0 / (d_in + d_out)).astype(jnp.float32)
        w_self = scale * jax.random.normal(k1, (d_in, d_out), jnp.float32)
        w_neigh = scale * jax.random.normal(k2, (d_in, d_out), jnp.float32)
        bias = 0.01 * jax.random.normal(k3, (1, d_out), jnp.float32)
        params.append((w_self, w_neigh, bias))
    return params


def large_baseline_graphsage_cluster_forward(blocks, x, params,
                                             force_tiled=False,
                                             tile_n=256, tile_k=256):
    """Forward pass matching LargeBaselineGraphSAGECluster.forward (eval mode).

    blocks: list of dense raw adjacency matrices (one per layer), shape (N, N)
    x     : (N, in_feats) node features
    params: list of (w_self, w_neigh, bias) per layer
    """
    # TODO(synk): nn.Dropout(0.5) is identity in eval mode; training-mode
    # stochastic dropout (pltpu.prng_random_bits masking) not applied here.
    num_layers = len(params)
    n, in_feats = x.shape
    h_feats = params[-1][0].shape[1]
    # Lane-dense padded feature width (+1 lane reserved for the ones column).
    dp = _round_up(max(in_feats, h_feats) + 1, 128)

    # Rough VMEM estimate for the fully-fused (all-layers) path.
    n_small = _round_up(n, 128)
    fused_bytes = (2 * n_small * n_small * 2      # double-buffered bf16 A block
                   + 4 * dp * dp * 4              # W_self / W_neigh blocks
                   + 4 * n_small * dp * 4         # x + out blocks
                   + n_small * dp * 4)            # resident H scratch
    use_fused = (not force_tiled) and fused_bytes <= 24 * 1024 * 1024

    if use_fused:
        x_pad = _pad_features(x, n_small, dp)
        a_stack = jnp.stack([_pad_adjacency(a, n_small) for a in blocks])
        ws_stack = jnp.stack([_build_self_weight(ws, b, dp)
                              for (ws, _, b) in params])
        wn_stack = jnp.stack([_build_neigh_weight(wn, dp)
                              for (_, wn, _) in params])
        out = _fused_layers_call(a_stack, ws_stack, wn_stack, x_pad, dp)
        return out[:n, :h_feats]

    # Large-graph path: per-layer K-tiled kernel, bounded VMEM per step.
    n_pad = _round_up(n, max(tile_n, tile_k))
    h = _pad_features(x, n_pad, dp)
    for l, (adj, (ws, wn, b)) in enumerate(zip(blocks, params)):
        a_pad = _pad_adjacency(adj, n_pad)
        h = sage_conv_layer_tiled(a_pad, h,
                                  _build_self_weight(ws, b, dp),
                                  _build_neigh_weight(wn, dp),
                                  apply_relu=(l != num_layers - 1),
                                  tile_n=tile_n, tile_k=tile_k)
    return h[:n, :h_feats]


def _reference_forward(blocks, x, params):
    """Pure-JAX f32 reference (mirrors the PyTorch module in eval mode)."""
    h = x.astype(jnp.float32)
    num_layers = len(params)
    for l, (adj, (ws, wn, bias)) in enumerate(zip(blocks, params)):
        deg = jnp.maximum(jnp.sum(adj, axis=1, keepdims=True), 1.0)
        agg = (adj @ h) / deg
        h = h @ ws + agg @ wn + bias
        if l != num_layers - 1:
            h = jnp.maximum(h, 0.0)
    return h


# ----------------------------------------------------------------------------
# Example run
# ----------------------------------------------------------------------------
if __name__ == "__main__":
    N = 256          # number of nodes per block
    IN_FEATS = 32
    H_FEATS = 32
    NUM_LAYERS = 3
    NUM_CLASSES = 4  # unused by forward (matches the PyTorch module)

    key = jax.random.PRNGKey(0)
    key, kx, kparams = jax.random.split(key, 3)

    # Node features.
    x = jax.random.normal(kx, (N, IN_FEATS), jnp.float32)

    # One dense random block (adjacency) per layer, Bernoulli(0.1).
    blocks = []
    for _ in range(NUM_LAYERS):
        key, ka = jax.random.split(key)
        blocks.append((jax.random.uniform(ka, (N, N)) < 0.1).astype(jnp.float32))

    params = init_params(kparams, IN_FEATS, H_FEATS, NUM_LAYERS)

    fwd = jax.jit(large_baseline_graphsage_cluster_forward,
                  static_argnames=("force_tiled", "tile_n", "tile_k"))

    # Primary path: all layers fused in a single pallas_call.
    out_fused = jax.block_until_ready(fwd(blocks, x, params))
    # Large-graph path (K-tiled per-layer kernel) with multiple K tiles.
    out_tiled = jax.block_until_ready(
        fwd(blocks, x, params, force_tiled=True, tile_n=128, tile_k=128))

    ref = _reference_forward(blocks, x, params)
    tol = 5e-2 * max(1.0, float(jnp.max(jnp.abs(ref))))

    assert out_fused.shape == (N, H_FEATS), out_fused.shape
    assert out_fused.dtype == jnp.float32, out_fused.dtype
    assert bool(jnp.all(jnp.isfinite(out_fused)))
    assert float(jnp.max(jnp.abs(out_fused - ref))) < tol
    assert out_tiled.shape == (N, H_FEATS), out_tiled.shape
    assert float(jnp.max(jnp.abs(out_tiled - ref))) < tol

    print("KERNEL_OK")
</pallas_src>

<mosaic_0001>
module attributes {stable_mosaic.version = 11 : i64} {
  func.func @_fused_layers_kernel(%arg0: i32, %arg1: memref<1x256x256xbf16, #tpu.memory_space<vmem>>, %arg2: memref<1x128x128xf32, #tpu.memory_space<vmem>>, %arg3: memref<1x128x128xf32, #tpu.memory_space<vmem>>, %arg4: memref<256x128xf32, #tpu.memory_space<vmem>>, %arg5: memref<256x128xf32, #tpu.memory_space<vmem>>, %arg6: memref<256x128xf32, #tpu.memory_space<vmem>>) attributes {dimension_semantics = [#tpu.dimension_semantics<arbitrary>], iteration_bounds = array<i64: 3>, scalar_prefetch = 0 : i64, scratch_operands = 1 : i64, tpu.core_type = #tpu.core_type<tc>, window_params = [{transform_indices = @transform_0, window_bounds = array<i64: 1, 256, 256>}, {transform_indices = @transform_1, window_bounds = array<i64: 1, 128, 128>}, {transform_indices = @transform_2, window_bounds = array<i64: 1, 128, 128>}, {pipeline_mode = #tpu.pipeline_mode<synchronous>, transform_indices = @transform_3, window_bounds = array<i64: 256, 128>}, {pipeline_mode = #tpu.pipeline_mode<synchronous>, transform_indices = @transform_4, window_bounds = array<i64: 256, 128>}]} {
    %c0_i32 = arith.constant 0 : i32
    %0 = arith.cmpi eq, %arg0, %c0_i32 : i32
    %1 = arith.extui %0 : i1 to i32
    %c0_i32_0 = arith.constant 0 : i32
    %2 = arith.cmpi ne, %1, %c0_i32_0 : i32
    scf.if %2 {
      %c0_18 = arith.constant 0 : index
      %c0_19 = arith.constant 0 : index
      %28 = vector.load %arg4[%c0_18, %c0_19] : memref<256x128xf32, #tpu.memory_space<vmem>>, vector<256x128xf32>
      %c0_20 = arith.constant 0 : index
      %c0_21 = arith.constant 0 : index
      %29 = vector.load %arg6[%c0_20, %c0_21] : memref<256x128xf32, #tpu.memory_space<vmem>>, vector<256x128xf32>
      tpu.vector_store %arg6[%c0_20, %c0_21], %28 {strides = array<i32>} : memref<256x128xf32, #tpu.memory_space<vmem>>, vector<256x128xf32>,
    } else {
    }
    %c0 = arith.constant 0 : index
    %c0_1 = arith.constant 0 : index
    %3 = vector.load %arg6[%c0, %c0_1] : memref<256x128xf32, #tpu.memory_space<vmem>>, vector<256x128xf32>
    %c0_2 = arith.constant 0 : index
    %c0_3 = arith.constant 0 : index
    %c0_4 = arith.constant 0 : index
    %4 = vector.load %arg1[%c0_2, %c0_3, %c0_4] : memref<1x256x256xbf16, #tpu.memory_space<vmem>>, vector<1x256x256xbf16>
    %5 = vector.shape_cast %4 : vector<1x256x256xbf16> to vector<256x256xbf16>
    %6 = arith.truncf %3 : vector<256x128xf32> to vector<256x128xbf16>
    %cst = arith.constant dense<0.000000e+00> : vector<256x128xf32>
    %7 = tpu.matmul %5, %6, %cst {dimension_numbers = #tpu.dot_dimension_numbers<[1], [0], [0], [1], [0, 0, 1, 1], [], []>} : vector<256x256xbf16>, vector<256x128xbf16>, vector<256x128xf32> -> vector<256x128xf32>
    %8 = vector.extract_strided_slice %7 {offsets = [0, 127], sizes = [256, 1], strides = [1, 1]} : vector<256x128xf32> to vector<256x1xf32>
    %cst_5 = arith.constant 1.000000e+00 : f32
    %9 = vector.broadcast %cst_5 : f32 to vector<256x1xf32>
    %10 = arith.maximumf %8, %9 : vector<256x1xf32>
    %cst_6 = arith.constant 1.000000e+00 : f32
    %11 = vector.broadcast %cst_6 : f32 to vector<256x1xf32>
    %12 = arith.divf %11, %10 : vector<256x1xf32>
    %13 = vector.broadcast %12 : vector<256x1xf32> to vector<256x128xf32>
    %14 = arith.mulf %7, %13 : vector<256x128xf32>
    %c0_7 = arith.constant 0 : index
    %c0_8 = arith.constant 0 : index
    %c0_9 = arith.constant 0 : index
    %15 = vector.load %arg2[%c0_7, %c0_8, %c0_9] : memref<1x128x128xf32, #tpu.memory_space<vmem>>, vector<1x128x128xf32>
    %16 = vector.shape_cast %15 : vector<1x128x128xf32> to vector<128x128xf32>
    %cst_10 = arith.constant dense<0.000000e+00> : vector<256x128xf32>
    %17 = tpu.matmul %3, %16, %cst_10 {dimension_numbers = #tpu.dot_dimension_numbers<[1], [0], [0], [1], [0, 0, 1, 1], [], []>} : vector<256x128xf32>, vector<128x128xf32>, vector<256x128xf32> -> vector<256x128xf32>
    %c0_11 = arith.constant 0 : index
    %c0_12 = arith.constant 0 : index
    %c0_13 = arith.constant 0 : index
    %18 = vector.load %arg3[%c0_11, %c0_12, %c0_13] : memref<1x128x128xf32, #tpu.memory_space<vmem>>, vector<1x128x128xf32>
    %19 = vector.shape_cast %18 : vector<1x128x128xf32> to vector<128x128xf32>
    %cst_14 = arith.constant dense<0.000000e+00> : vector<256x128xf32>
    %20 = tpu.matmul %14, %19, %cst_14 {dimension_numbers = #tpu.dot_dimension_numbers<[1], [0], [0], [1], [0, 0, 1, 1], [], []>} : vector<256x128xf32>, vector<128x128xf32>, vector<256x128xf32> -> vector<256x128xf32>
    %21 = arith.addf %17, %20 : vector<256x128xf32>
    %c2_i32 = arith.constant 2 : i32
    %22 = arith.cmpi eq, %arg0, %c2_i32 : i32
    %23 = arith.extui %22 : i1 to i32
    %c0_i32_15 = arith.constant 0 : i32
    %24 = arith.cmpi ne, %23, %c0_i32_15 : i32
    scf.if %24 {
      %c0_18 = arith.constant 0 : index
      %c0_19 = arith.constant 0 : index
      %28 = vector.load %arg5[%c0_18, %c0_19] : memref<256x128xf32, #tpu.memory_space<vmem>>, vector<256x128xf32>
      tpu.vector_store %arg5[%c0_18, %c0_19], %21 {strides = array<i32>} : memref<256x128xf32, #tpu.memory_space<vmem>>, vector<256x128xf32>,
    } else {
    }
    %c2_i32_16 = arith.constant 2 : i32
    %25 = arith.cmpi slt, %arg0, %c2_i32_16 : i32
    %26 = arith.extui %25 : i1 to i32
    %c0_i32_17 = arith.constant 0 : i32
    %27 = arith.cmpi ne, %26, %c0_i32_17 : i32
    scf.if %27 {
      %cst_18 = arith.constant 0.000000e+00 : f32
      %28 = vector.broadcast %cst_18 : f32 to vector<256x128xf32>
      %29 = arith.maximumf %21, %28 : vector<256x128xf32>
      %c0_19 = arith.constant 0 : index
      %c0_20 = arith.constant 0 : index
      %30 = vector.load %arg6[%c0_19, %c0_20] : memref<256x128xf32, #tpu.memory_space<vmem>>, vector<256x128xf32>
      tpu.vector_store %arg6[%c0_19, %c0_20], %29 {strides = array<i32>} : memref<256x128xf32, #tpu.memory_space<vmem>>, vector<256x128xf32>,
    } else {
    }
    return
  }
  func.func @transform_0(%arg0: i32) -> (i32, i32, i32) {
    %c0_i32 = arith.constant 0 : i32
    %c0_i32_0 = arith.constant 0 : i32
    %c0_i32_1 = arith.constant 0 : i32
    return %arg0, %c0_i32, %c0_i32_0 : i32, i32, i32
  }
  func.func @transform_1(%arg0: i32) -> (i32, i32, i32) {
    %c0_i32 = arith.constant 0 : i32
    %c0_i32_0 = arith.constant 0 : i32
    %c0_i32_1 = arith.constant 0 : i32
    return %arg0, %c0_i32, %c0_i32_0 : i32, i32, i32
  }
  func.func @transform_2(%arg0: i32) -> (i32, i32, i32) {
    %c0_i32 = arith.constant 0 : i32
    %c0_i32_0 = arith.constant 0 : i32
    %c0_i32_1 = arith.constant 0 : i32
    return %arg0, %c0_i32, %c0_i32_0 : i32, i32, i32
  }
  func.func @transform_3(%arg0: i32) -> (i32, i32) {
    %c0_i32 = arith.constant 0 : i32
    %c0_i32_0 = arith.constant 0 : i32
    %c0_i32_1 = arith.constant 0 : i32
    return %c0_i32, %c0_i32_0 : i32, i32
  }
  func.func @transform_4(%arg0: i32) -> (i32, i32) {
    %c0_i32 = arith.constant 0 : i32
    %c0_i32_0 = arith.constant 0 : i32
    %c0_i32_1 = arith.constant 0 : i32
    return %c0_i32, %c0_i32_0 : i32, i32
  }
}

</mosaic_0001>

<llo_original>
// kernel: large_baseline_graphsage_cluster_forward.1
$region0: #{large_baseline_graphsage_cluster_forward.1}
  #allocation0 [shape = 'u32[]', space=smem, size = 0x4, offset = 0x4, fixed_abs, tag = 'smem constant byte address 0x4 - core index']
  #allocation1 [shape = 'u32[144,128]{1,0:T(1,128)}', space=vmem, size = 0x12000, scoped, tag = 'internal scratch']
  #allocation2 [shape = 'f32[256,128]{1,0:T(8,128)}', space=vmem, size = 0x20000, scoped, tag = 'scratch operand']
  %s0 = inlined_call_operand.vmem [shape: bf16[3,256,256], index: 0, kind: input, shape index: {}]
  %s1 = inlined_call_operand.vmem [shape: f32[3,128,128], index: 1, kind: input, shape index: {}]
  %s2 = inlined_call_operand.vmem [shape: f32[3,128,128], index: 2, kind: input, shape index: {}]
  %s3 = inlined_call_operand.vmem [shape: f32[256,128], index: 3, kind: input, shape index: {}]
  %s4 = inlined_call_operand.vmem [shape: f32[256,128], index: 4, kind: output, shape index: {}]
  %s5 = sld [smem:[#allocation0]]
  $region61: #{large_baseline_graphsage_cluster_forward.1} parent=0
    _
  %s7 = ssub.s32 1, %s5
  %s8 = scalar_select 0, %s7, %s5
  loop: start=0, step=1, limit=5
  $region2: #{large_baseline_graphsage_cluster_forward.1} parent=0 // loop_pre_header
    _
  $region3: #{large_baseline_graphsage_cluster_forward.1} parent=0 // loop_header
    %s10 = sphi 0, %s14
    %p11 = scmp.ge.s32.totalorder %s10, 5
    %s20 = sphi 0, %s22
    %s23 = sphi 0, %s20
    %s24 = sphi 0, %s23
    %s40 = sphi 0, %s24
    %s46 = sphi 0, %s48
    %s49 = sphi 0, %s46
    %s50 = sphi 0, %s49
    %s66 = sphi 0, %s50
    %s72 = sphi 0, %s74
    %s75 = sphi 0, %s72
    %s76 = sphi 0, %s75
    %s92 = sphi 0, %s76
    %s96 = sphi 0, %s96
    %s98 = sphi 0, %s96
    %s99 = sphi 0, %s98
    %s113 = sphi 0, %s99
    %s117 = sphi 0, %s117
    %s119 = sphi 0, %s117
    %s120 = sphi 0, %s119
    %s134 = sphi 0, %s120
  $region4: #{large_baseline_graphsage_cluster_forward.1} parent=0 // loop_header_branch
    %13 = sbr.rel (%p11) target = $region8
  $region5: #{large_baseline_graphsage_cluster_forward.1} parent=0 // loop_body
    %s15 = ssub.s32 %s10, 1
    %s16 = ssub.s32 %s10, 2
    %s17 = sadd.s32 %s10, 1
    %s18 = ssub.s32 %s10, %s17
    %p19 = scmp.eq.s32.totalorder %s18, 0
    %s21 = sadd.s32 %s20, 1
    %s22 = scalar_select %p19, %s20, %s21
    %p25 = pneg %p19
    %p26 = scmp.eq.s32.totalorder %s10, 2
    %p27 = por %p25, %p26
    %p28 = scmp.ne.s32.totalorder %s20, %s23
    %p29 = scmp.eq.s32.totalorder %s10, 0
    %p30 = por %p28, %p29
    %p31 = scmp.ne.s32.totalorder %s20, %s23
    %p32 = scmp.eq.s32.totalorder %s15, 2
    %p33 = por %p31, %p32
    %p34 = scmp.ne.s32.totalorder %s23, %s24
    %p35 = scmp.eq.s32.totalorder %s15, 0
    %p36 = por %p34, %p35
    %p37 = scmp.ne.s32.totalorder %s23, %s24
    %p38 = scmp.eq.s32.totalorder %s16, 2
    %p39 = por %p37, %p38
    %p41 = scmp.ne.s32.totalorder %s24, %s40
    %p42 = scmp.eq.s32.totalorder %s16, 0
    %p43 = por %p41, %p42
    %s44 = ssub.s32 %s10, %s17
    %p45 = scmp.eq.s32.totalorder %s44, 0
    %s47 = sadd.s32 %s46, 1
    %s48 = scalar_select %p45, %s46, %s47
    %p51 = pneg %p45
    %p52 = scmp.eq.s32.totalorder %s10, 2
    %p53 = por %p51, %p52
    %p54 = scmp.ne.s32.totalorder %s46, %s49
    %p55 = scmp.eq.s32.totalorder %s10, 0
    %p56 = por %p54, %p55
    %p57 = scmp.ne.s32.totalorder %s46, %s49
    %p58 = scmp.eq.s32.totalorder %s15, 2
    %p59 = por %p57, %p58
    %p60 = scmp.ne.s32.totalorder %s49, %s50
    %p61 = scmp.eq.s32.totalorder %s15, 0
    %p62 = por %p60, %p61
    %p63 = scmp.ne.s32.totalorder %s49, %s50
    %p64 = scmp.eq.s32.totalorder %s16, 2
    %p65 = por %p63, %p64
    %p67 = scmp.ne.s32.totalorder %s50, %s66
    %p68 = scmp.eq.s32.totalorder %s16, 0
    %p69 = por %p67, %p68
    %s70 = ssub.s32 %s10, %s17
    %p71 = scmp.eq.s32.totalorder %s70, 0
    %s73 = sadd.s32 %s72, 1
    %s74 = scalar_select %p71, %s72, %s73
    %p77 = pneg %p71
    %p78 = scmp.eq.s32.totalorder %s10, 2
    %p79 = por %p77, %p78
    %p80 = scmp.ne.s32.totalorder %s72, %s75
    %p81 = scmp.eq.s32.totalorder %s10, 0
    %p82 = por %p80, %p81
    %p83 = scmp.ne.s32.totalorder %s72, %s75
    %p84 = scmp.eq.s32.totalorder %s15, 2
    %p85 = por %p83, %p84
    %p86 = scmp.ne.s32.totalorder %s75, %s76
    %p87 = scmp.eq.s32.totalorder %s15, 0
    %p88 = por %p86, %p87
    %p89 = scmp.ne.s32.totalorder %s75, %s76
    %p90 = scmp.eq.s32.totalorder %s16, 2
    %p91 = por %p89, %p90
    %p93 = scmp.ne.s32.totalorder %s76, %s92
    %p94 = scmp.eq.s32.totalorder %s16, 0
    %p95 = por %p93, %p94
    %s97 = sadd.s32 %s96, 1
    %p100 = scmp.eq.s32.totalorder %s10, 2
    %p101 = scmp.ne.s32.totalorder %s96, %s98
    %p102 = scmp.eq.s32.totalorder %s10, 0
    %p103 = por %p101, %p102
    %p104 = scmp.ne.s32.totalorder %s96, %s98
    %p105 = scmp.eq.s32.totalorder %s15, 2
    %p106 = por %p104, %p105
    %p107 = scmp.ne.s32.totalorder %s98, %s99
    %p108 = scmp.eq.s32.totalorder %s15, 0
    %p109 = por %p107, %p108
    %p110 = scmp.ne.s32.totalorder %s98, %s99
    %p111 = scmp.eq.s32.totalorder %s16, 2
    %p112 = por %p110, %p111
    %p114 = scmp.ne.s32.totalorder %s99, %s113
    %p115 = scmp.eq.s32.totalorder %s16, 0
    %p116 = por %p114, %p115
    %s118 = sadd.s32 %s117, 1
    %p121 = scmp.eq.s32.totalorder %s10, 2
    %p122 = scmp.ne.s32.totalorder %s117, %s119
    %p123 = scmp.eq.s32.totalorder %s10, 0
    %p124 = por %p122, %p123
    %p125 = scmp.ne.s32.totalorder %s117, %s119
    %p126 = scmp.eq.s32.totalorder %s15, 2
    %p127 = por %p125, %p126
    %p128 = scmp.ne.s32.totalorder %s119, %s120
    %p129 = scmp.eq.s32.totalorder %s15, 0
    %p130 = por %p128, %p129
    %p131 = scmp.ne.s32.totalorder %s119, %s120
    %p132 = scmp.eq.s32.totalorder %s16, 2
    %p133 = por %p131, %p132
    %p135 = scmp.ne.s32.totalorder %s120, %s134
    %p136 = scmp.eq.s32.totalorder %s16, 0
    %p137 = por %p135, %p136
    %p138 = scmp.le.s32.totalorder 1, %s10
    %p139 = scmp.lt.s32.totalorder %s10, 4
    %p140 = pnand %p138, %p139
    %p141 = pneg %p140
    // Predicated region
    $region9: #{large_baseline_graphsage_cluster_forward.1} parent=5 // pred_check
      _
    $region10: #{large_baseline_graphsage_cluster_forward.1} parent=5 // pred_check_branch
      %143 = sbr.rel (%p140) target = $region12
    $region11: #{large_baseline_graphsage_cluster_forward.1} parent=5 // pred_region
      %s144 = ssub.s32 %s10, 1
      // Predicated region
      $region13: #{large_baseline_graphsage_cluster_forward.1} parent=11 // pred_check
        %p145 = pneg %p109
      $region14: #{large_baseline_graphsage_cluster_forward.1} parent=11 // pred_check_branch
        %147 = sbr.rel (%p145) target = $region16
      $region15: #{large_baseline_graphsage_cluster_forward.1} parent=11 // pred_region
        _
      $region16: #{large_baseline_graphsage_cluster_forward.1} parent=11 // pred_fallthru
        _
    $region12: #{large_baseline_graphsage_cluster_forward.1} parent=5 // pred_fallthru
      _
    %p148 = scmp.lt.s32.totalorder %s10, 3
    // Predicated region
    $region17: #{large_baseline_graphsage_cluster_forward.1} parent=5 // pred_check
      %p149 = pneg %p148
    $region18: #{large_baseline_graphsage_cluster_forward.1} parent=5 // pred_check_branch
      %151 = sbr.rel (%p149) target = $region20
    $region19: #{large_baseline_graphsage_cluster_forward.1} parent=5 // pred_region
      // Predicated region
      $region21: #{large_baseline_graphsage_cluster_forward.1} parent=19 // pred_check
        %p152 = pneg %p30
      $region22: #{large_baseline_graphsage_cluster_forward.1} parent=19 // pred_check_branch
        %154 = sbr.rel (%p152) target = $region24
      $region23: #{large_baseline_graphsage_cluster_forward.1} parent=19 // pred_region
        %p155 = scmp.lt.s32.totalorder %s10, 2
        %s156 = scalar_select %p155, %s10, 2
        %s157 = smul.addr %s156, 64
        %s158 = smul.addr %s157, 4
        %s159 = scalar_lea.vmem %s0, %s158
      $region24: #{large_baseline_graphsage_cluster_forward.1} parent=19 // pred_fallthru
        _
      // Predicated region
      $region25: #{large_baseline_graphsage_cluster_forward.1} parent=19 // pred_check
        %p160 = pneg %p56
      $region26: #{large_baseline_graphsage_cluster_forward.1} parent=19 // pred_check_branch
        %162 = sbr.rel (%p160) target = $region28
      $region27: #{large_baseline_graphsage_cluster_forward.1} parent=19 // pred_region
        %p163 = scmp.lt.s32.totalorder %s10, 2
        %s164 = scalar_select %p163, %s10, 2
        %s165 = smul.addr %s164, 16
        %s166 = smul.addr %s165, 8
        %s167 = scalar_lea.vmem %s1, %s166
      $region28: #{large_baseline_graphsage_cluster_forward.1} parent=19 // pred_fallthru
        _
      // Predicated region
      $region29: #{large_baseline_graphsage_cluster_forward.1} parent=19 // pred_check
        %p168 = pneg %p82
      $region30: #{large_baseline_graphsage_cluster_forward.1} parent=19 // pred_check_branch
        %170 = sbr.rel (%p168) target = $region32
      $region31: #{large_baseline_graphsage_cluster_forward.1} parent=19 // pred_region
        %p171 = scmp.lt.s32.totalorder %s10, 2
        %s172 = scalar_select %p171, %s10, 2
        %s173 = smul.addr %s172, 16
        %s174 = smul.addr %s173, 8
        %s175 = scalar_lea.vmem %s2, %s174
      $region32: #{large_baseline_graphsage_cluster_forward.1} parent=19 // pred_fallthru
        _
    $region20: #{large_baseline_graphsage_cluster_forward.1} parent=5 // pred_fallthru
      _
    %p176 = scmp.le.s32.totalorder 1, %s10
    %p177 = scmp.lt.s32.totalorder %s10, 4
    %p178 = pnand %p176, %p177
    %p179 = pneg %p178
    // Predicated region
    $region33: #{large_baseline_graphsage_cluster_forward.1} parent=5 // pred_check
      _
    $region34: #{large_baseline_graphsage_cluster_forward.1} parent=5 // pred_check_branch
      %181 = sbr.rel (%p178) target = $region36
    $region35: #{large_baseline_graphsage_cluster_forward.1} parent=5 // pred_region
      %s182 = ssub.s32 %s10, 1
      %p183 = scmp.lt.s32.totalorder %s15, 2
      %s184 = scalar_select %p183, %s15, 2
      %s185 = smul.addr %s184, 64
      %s186 = smul.addr %s185, 4
      %s187 = scalar_lea.vmem %s0, %s186
      %p188 = pneg %p36
      %p189 = pneg %p33
      %p190 = scmp.lt.s32.totalorder %s15, 2
      %s191 = scalar_select %p190, %s15, 2
      %s192 = smul.addr %s191, 16
      %s193 = smul.addr %s192, 8
      %s194 = scalar_lea.vmem %s1, %s193
      %p195 = pneg %p62
      %p196 = pneg %p59
      %p197 = scmp.lt.s32.totalorder %s15, 2
      %s198 = scalar_select %p197, %s15, 2
      %s199 = smul.addr %s198, 16
      %s200 = smul.addr %s199, 8
      %s201 = scalar_lea.vmem %s2, %s200
      %p202 = pneg %p88
      %p203 = pneg %p85
      %p204 = pneg %p109
      %p205 = pneg %p106
      %p206 = pneg %p130
      %p207 = pneg %p127
      %p208 = scmp.lt.s32.totalorder %s15, 2
      %s209 = scalar_select %p208, %s15, 2
      %s210 = smul.addr %s209, 64
      %s211 = smul.addr %s210, 4
      %s212 = scalar_lea.vmem %s0, %s211
      %p213 = scmp.lt.s32.totalorder %s15, 2
      %s214 = scalar_select %p213, %s15, 2
      %s215 = smul.addr %s214, 16
      %s216 = smul.addr %s215, 8
      %s217 = scalar_lea.vmem %s1, %s216
      %p218 = scmp.lt.s32.totalorder %s15, 2
      %s219 = scalar_select %p218, %s15, 2
      %s220 = smul.addr %s219, 16
      %s221 = smul.addr %s220, 8
      %s222 = scalar_lea.vmem %s2, %s221
      %p224 = scmp.eq.s32.totalorder %s15, 0
      // Predicated region
      $region37: #{large_baseline_graphsage_cluster_forward.1} parent=35 // pred_check
        %p225 = pneg %p224
      $region38: #{large_baseline_graphsage_cluster_forward.1} parent=35 // pred_check_branch
        %227 = sbr.rel (%p225) target = $region40
      $region39: #{large_baseline_graphsage_cluster_forward.1} parent=35 // pred_region
        %v228 = vld [vmem:[%s3] sm:$0xff]
        %v229 = vld [vmem:[%s3 + $0x8] sm:$0xff]
        %v230 = vld [vmem:[%s3 + $0x10] sm:$0xff]
        %v231 = vld [vmem:[%s3 + $0x18] sm:$0xff]
        %v232 = vld [vmem:[%s3 + $0x20] sm:$0xff]
        %v233 = vld [vmem:[%s3 + $0x28] sm:$0xff]
        %v234 = vld [vmem:[%s3 + $0x30] sm:$0xff]
        %v235 = vld [vmem:[%s3 + $0x38] sm:$0xff]
        %v236 = vld [vmem:[%s3 + $0x40] sm:$0xff]
        %v237 = vld [vmem:[%s3 + $0x48] sm:$0xff]
        %v238 = vld [vmem:[%s3 + $0x50] sm:$0xff]
        %v239 = vld [vmem:[%s3 + $0x58] sm:$0xff]
        %v240 = vld [vmem:[%s3 + $0x60] sm:$0xff]
        %v241 = vld [vmem:[%s3 + $0x68] sm:$0xff]
        %v242 = vld [vmem:[%s3 + $0x70] sm:$0xff]
        %v243 = vld [vmem:[%s3 + $0x78] sm:$0xff]
        %v244 = vld [vmem:[%s3 + $0x80] sm:$0xff]
        %v245 = vld [vmem:[%s3 + $0x88] sm:$0xff]
        %v246 = vld [vmem:[%s3 + $0x90] sm:$0xff]
        %v247 = vld [vmem:[%s3 + $0x98] sm:$0xff]
        %v248 = vld [vmem:[%s3 + $0xa0] sm:$0xff]
        %v249 = vld [vmem:[%s3 + $0xa8] sm:$0xff]
        %v250 = vld [vmem:[%s3 + $0xb0] sm:$0xff]
        %v251 = vld [vmem:[%s3 + $0xb8] sm:$0xff]
        %v252 = vld [vmem:[%s3 + $0xc0] sm:$0xff]
        %v253 = vld [vmem:[%s3 + $0xc8] sm:$0xff]
        %v254 = vld [vmem:[%s3 + $0xd0] sm:$0xff]
        %v255 = vld [vmem:[%s3 + $0xd8] sm:$0xff]
        %v256 = vld [vmem:[%s3 + $0xe0] sm:$0xff]
        %v257 = vld [vmem:[%s3 + $0xe8] sm:$0xff]
        %v258 = vld [vmem:[%s3 + $0xf0] sm:$0xff]
        %v259 = vld [vmem:[%s3 + $0xf8] sm:$0xff]
        %260 = vst [vmem:[#allocation2] sm:$0xff] %v228
        %261 = vst [vmem:[#allocation2 + $0x8] sm:$0xff] %v229
        %262 = vst [vmem:[#allocation2 + $0x10] sm:$0xff] %v230
        %263 = vst [vmem:[#allocation2 + $0x18] sm:$0xff] %v231
        %264 = vst [vmem:[#allocation2 + $0x20] sm:$0xff] %v232
        %265 = vst [vmem:[#allocation2 + $0x28] sm:$0xff] %v233
        %266 = vst [vmem:[#allocation2 + $0x30] sm:$0xff] %v234
        %267 = vst [vmem:[#allocation2 + $0x38] sm:$0xff] %v235
        %268 = vst [vmem:[#allocation2 + $0x40] sm:$0xff] %v236
        %269 = vst [vmem:[#allocation2 + $0x48] sm:$0xff] %v237
        %270 = vst [vmem:[#allocation2 + $0x50] sm:$0xff] %v238
        %271 = vst [vmem:[#allocation2 + $0x58] sm:$0xff] %v239
        %272 = vst [vmem:[#allocation2 + $0x60] sm:$0xff] %v240
        %273 = vst [vmem:[#allocation2 + $0x68] sm:$0xff] %v241
        %274 = vst [vmem:[#allocation2 + $0x70] sm:$0xff] %v242
        %275 = vst [vmem:[#allocation2 + $0x78] sm:$0xff] %v243
        %276 = vst [vmem:[#allocation2 + $0x80] sm:$0xff] %v244
        %277 = vst [vmem:[#allocation2 + $0x88] sm:$0xff] %v245
        %278 = vst [vmem:[#allocation2 + $0x90] sm:$0xff] %v246
        %279 = vst [vmem:[#allocation2 + $0x98] sm:$0xff] %v247
        %280 = vst [vmem:[#allocation2 + $0xa0] sm:$0xff] %v248
        %281 = vst [vmem:[#allocation2 + $0xa8] sm:$0xff] %v249
        %282 = vst [vmem:[#allocation2 + $0xb0] sm:$0xff] %v250
        %283 = vst [vmem:[#allocation2 + $0xb8] sm:$0xff] %v251
        %284 = vst [vmem:[#allocation2 + $0xc0] sm:$0xff] %v252
        %285 = vst [vmem:[#allocation2 + $0xc8] sm:$0xff] %v253
        %286 = vst [vmem:[#allocation2 + $0xd0] sm:$0xff] %v254
        %287 = vst [vmem:[#allocation2 + $0xd8] sm:$0xff] %v255
        %288 = vst [vmem:[#allocation2 + $0xe0] sm:$0xff] %v256
        %289 = vst [vmem:[#allocation2 + $0xe8] sm:$0xff] %v257
        %290 = vst [vmem:[#allocation2 + $0xf0] sm:$0xff] %v258
        %291 = vst [vmem:[#allocation2 + $0xf8] sm:$0xff] %v259
      $region40: #{large_baseline_graphsage_cluster_forward.1} parent=35 // pred_fallthru
        _
      %v292 = vld [vmem:[#allocation2] sm:$0xff]
      %v293 = vld [vmem:[#allocation2 + $0x8] sm:$0xff]
      %v294 = vld [vmem:[#allocation2 + $0x10] sm:$0xff]
      %v295 = vld [vmem:[#allocation2 + $0x18] sm:$0xff]
      %v296 = vld [vmem:[#allocation2 + $0x20] sm:$0xff]
      %v297 = vld [vmem:[#allocation2 + $0x28] sm:$0xff]
      %v298 = vld [vmem:[#allocation2 + $0x30] sm:$0xff]
      %v299 = vld [vmem:[#allocation2 + $0x38] sm:$0xff]
      %v300 = vld [vmem:[#allocation2 + $0x40] sm:$0xff]
      %v301 = vld [vmem:[#allocation2 + $0x48] sm:$0xff]
      %v302 = vld [vmem:[#allocation2 + $0x50] sm:$0xff]
      %v303 = vld [vmem:[#allocation2 + $0x58] sm:$0xff]
      %v304 = vld [vmem:[#allocation2 + $0x60] sm:$0xff]
      %v305 = vld [vmem:[#allocation2 + $0x68] sm:$0xff]
      %v306 = vld [vmem:[#allocation2 + $0x70] sm:$0xff]
      %v307 = vld [vmem:[#allocation2 + $0x78] sm:$0xff]
      %v308 = vld [vmem:[#allocation2 + $0x80] sm:$0xff]
      %v309 = vld [vmem:[#allocation2 + $0x88] sm:$0xff]
      %v310 = vld [vmem:[#allocation2 + $0x90] sm:$0xff]
      %v311 = vld [vmem:[#allocation2 + $0x98] sm:$0xff]
      %v312 = vld [vmem:[#allocation2 + $0xa0] sm:$0xff]
      %v313 = vld [vmem:[#allocation2 + $0xa8] sm:$0xff]
      %v314 = vld [vmem:[#allocation2 + $0xb0] sm:$0xff]
      %v315 = vld [vmem:[#allocation2 + $0xb8] sm:$0xff]
      %v316 = vld [vmem:[#allocation2 + $0xc0] sm:$0xff]
      %v317 = vld [vmem:[#allocation2 + $0xc8] sm:$0xff]
      %v318 = vld [vmem:[#allocation2 + $0xd0] sm:$0xff]
      %v319 = vld [vmem:[#allocation2 + $0xd8] sm:$0xff]
      %v320 = vld [vmem:[#allocation2 + $0xe0] sm:$0xff]
      %v321 = vld [vmem:[#allocation2 + $0xe8] sm:$0xff]
      %v322 = vld [vmem:[#allocation2 + $0xf0] sm:$0xff]
      %v323 = vld [vmem:[#allocation2 + $0xf8] sm:$0xff]
      %v324 = vld [vmem:[%s212] sm:$0xff]
      %v325 = vld [vmem:[%s212 + $0x8] sm:$0xff]
      %v326 = vld [vmem:[%s212 + $0x10] sm:$0xff]
      %v327 = vld [vmem:[%s212 + $0x18] sm:$0xff]
      %v328 = vld [vmem:[%s212 + $0x20] sm:$0xff]
      %v329 = vld [vmem:[%s212 + $0x28] sm:$0xff]
      %v330 = vld [vmem:[%s212 + $0x30] sm:$0xff]
      %v331 = vld [vmem:[%s212 + $0x38] sm:$0xff]
      %v332 = vld [vmem:[%s212 + $0x40] sm:$0xff]
      %v333 = vld [vmem:[%s212 + $0x48] sm:$0xff]
      %v334 = vld [vmem:[%s212 + $0x50] sm:$0xff]
      %v335 = vld [vmem:[%s212 + $0x58] sm:$0xff]
      %v336 = vld [vmem:[%s212 + $0x60] sm:$0xff]
      %v337 = vld [vmem:[%s212 + $0x68] sm:$0xff]
      %v338 = vld [vmem:[%s212 + $0x70] sm:$0xff]
      %v339 = vld [vmem:[%s212 + $0x78] sm:$0xff]
      %v340 = vld [vmem:[%s212 + $0x80] sm:$0xff]
      %v341 = vld [vmem:[%s212 + $0x88] sm:$0xff]
      %v342 = vld [vmem:[%s212 + $0x90] sm:$0xff]
      %v343 = vld [vmem:[%s212 + $0x98] sm:$0xff]
      %v344 = vld [vmem:[%s212 + $0xa0] sm:$0xff]
      %v345 = vld [vmem:[%s212 + $0xa8] sm:$0xff]
      %v346 = vld [vmem:[%s212 + $0xb0] sm:$0xff]
      %v347 = vld [vmem:[%s212 + $0xb8] sm:$0xff]
      %v348 = vld [vmem:[%s212 + $0xc0] sm:$0xff]
      %v349 = vld [vmem:[%s212 + $0xc8] sm:$0xff]
      %v350 = vld [vmem:[%s212 + $0xd0] sm:$0xff]
      %v351 = vld [vmem:[%s212 + $0xd8] sm:$0xff]
      %v352 = vld [vmem:[%s212 + $0xe0] sm:$0xff]
      %v353 = vld [vmem:[%s212 + $0xe8] sm:$0xff]
      %v354 = vld [vmem:[%s212 + $0xf0] sm:$0xff]
      %v355 = vld [vmem:[%s212 + $0xf8] sm:$0xff]
      %v356 = vpack.c.bf16 %v293, %v292
      %v357 = vpack.c.bf16 %v295, %v294
      %v358 = vpack.c.bf16 %v297, %v296
      %v359 = vpack.c.bf16 %v299, %v298
      %v360 = vpack.c.bf16 %v301, %v300
      %v361 = vpack.c.bf16 %v303, %v302
      %v362 = vpack.c.bf16 %v305, %v304
      %v363 = vpack.c.bf16 %v307, %v306
      %v364 = vpack.c.bf16 %v309, %v308
      %v365 = vpack.c.bf16 %v311, %v310
      %v366 = vpack.c.bf16 %v313, %v312
      %v367 = vpack.c.bf16 %v315, %v314
      %v368 = vpack.c.bf16 %v317, %v316
      %v369 = vpack.c.bf16 %v319, %v318
      %v370 = vpack.c.bf16 %v321, %v320
      %v371 = vpack.c.bf16 %v323, %v322
      %v404 = vunpack.c.l.b16 %v324
      %v405 = vunpack.c.h.b16 %v324
      %v406 = vunpack.c.l.b16 %v325
      %v407 = vunpack.c.h.b16 %v325
      %v408 = vunpack.c.l.b16 %v326
      %v409 = vunpack.c.h.b16 %v326
      %v410 = vunpack.c.l.b16 %v327
      %v411 = vunpack.c.h.b16 %v327
      %v412 = vunpack.c.l.b16 %v328
      %v413 = vunpack.c.h.b16 %v328
      %v414 = vunpack.c.l.b16 %v329
      %v415 = vunpack.c.h.b16 %v329
      %v416 = vunpack.c.l.b16 %v330
      %v417 = vunpack.c.h.b16 %v330
      %v418 = vunpack.c.l.b16 %v331
      %v419 = vunpack.c.h.b16 %v331
      %v420 = vunpack.c.l.b16 %v332
      %v421 = vunpack.c.h.b16 %v332
      %v422 = vunpack.c.l.b16 %v333
      %v423 = vunpack.c.h.b16 %v333
      %v424 = vunpack.c.l.b16 %v334
      %v425 = vunpack.c.h.b16 %v334
      %v426 = vunpack.c.l.b16 %v335
      %v427 = vunpack.c.h.b16 %v335
      %v428 = vunpack.c.l.b16 %v336
      %v429 = vunpack.c.h.b16 %v336
      %v430 = vunpack.c.l.b16 %v337
      %v431 = vunpack.c.h.b16 %v337
      %v432 = vunpack.c.l.b16 %v338
      %v433 = vunpack.c.h.b16 %v338
      %v434 = vunpack.c.l.b16 %v339
      %v435 = vunpack.c.h.b16 %v339
      %v436 = vunpack.c.l.b16 %v340
      %v437 = vunpack.c.h.b16 %v340
      %v438 = vunpack.c.l.b16 %v341
      %v439 = vunpack.c.h.b16 %v341
      %v440 = vunpack.c.l.b16 %v342
      %v441 = vunpack.c.h.b16 %v342
      %v442 = vunpack.c.l.b16 %v343
      %v443 = vunpack.c.h.b16 %v343
      %v444 = vunpack.c.l.b16 %v344
      %v445 = vunpack.c.h.b16 %v344
      %v446 = vunpack.c.l.b16 %v345
      %v447 = vunpack.c.h.b16 %v345
      %v448 = vunpack.c.l.b16 %v346
      %v449 = vunpack.c.h.b16 %v346
      %v450 = vunpack.c.l.b16 %v347
      %v451 = vunpack.c.h.b16 %v347
      %v452 = vunpack.c.l.b16 %v348
      %v453 = vunpack.c.h.b16 %v348
      %v454 = vunpack.c.l.b16 %v349
      %v455 = vunpack.c.h.b16 %v349
      %v456 = vunpack.c.l.b16 %v350
      %v457 = vunpack.c.h.b16 %v350
      %v458 = vunpack.c.l.b16 %v351
      %v459 = vunpack.c.h.b16 %v351
      %v460 = vunpack.c.l.b16 %v352
      %v461 = vunpack.c.h.b16 %v352
      %v462 = vunpack.c.l.b16 %v353
      %v463 = vunpack.c.h.b16 %v353
      %v464 = vunpack.c.l.b16 %v354
      %v465 = vunpack.c.h.b16 %v354
      %v466 = vunpack.c.l.b16 %v355
      %v467 = vunpack.c.h.b16 %v355
      %v468 = vpack.c.b16 %v406, %v404
      %v469 = vpack.c.b16 %v407, %v405
      %v470 = vpack.c.b16 %v410, %v408
      %v471 = vpack.c.b16 %v411, %v409
      %v472 = vpack.c.b16 %v414, %v412
      %v473 = vpack.c.b16 %v415, %v413
      %v474 = vpack.c.b16 %v418, %v416
      %v475 = vpack.c.b16 %v419, %v417
      %v476 = vpack.c.b16 %v422, %v420
      %v477 = vpack.c.b16 %v423, %v421
      %v478 = vpack.c.b16 %v426, %v424
      %v479 = vpack.c.b16 %v427, %v425
      %v480 = vpack.c.b16 %v430, %v428
      %v481 = vpack.c.b16 %v431, %v429
      %v482 = vpack.c.b16 %v434, %v432
      %v483 = vpack.c.b16 %v435, %v433
      %v484 = vpack.c.b16 %v438, %v436
      %v485 = vpack.c.b16 %v439, %v437
      %v486 = vpack.c.b16 %v442, %v440
      %v487 = vpack.c.b16 %v443, %v441
      %v488 = vpack.c.b16 %v446, %v444
      %v489 = vpack.c.b16 %v447, %v445
      %v490 = vpack.c.b16 %v450, %v448
      %v491 = vpack.c.b16 %v451, %v449
      %v492 = vpack.c.b16 %v454, %v452
      %v493 = vpack.c.b16 %v455, %v453
      %v494 = vpack.c.b16 %v458, %v456
      %v495 = vpack.c.b16 %v459, %v457
      %v496 = vpack.c.b16 %v462, %v460
      %v497 = vpack.c.b16 %v463, %v461
      %v498 = vpack.c.b16 %v466, %v464
      %v499 = vpack.c.b16 %v467, %v465
      %532 = vmatprep.subr.bf16.mxu0 0
      %533 = vmatpush1.bf16.msra.mxu0 %v363
      %534 = vmatprep.subr.bf16.mxu0 0
      %535 = vmatpush1.bf16.msra.mxu0 %v362
      %536 = vmatprep.subr.bf16.mxu0 0
      %537 = vmatpush1.bf16.msra.mxu0 %v361
      %538 = vmatprep.subr.bf16.mxu0 0
      %539 = vmatpush1.bf16.msra.mxu0 %v360
      %540 = vmatprep.subr.bf16.mxu0 0
      %541 = vmatpush1.bf16.msra.mxu0 %v359
      %542 = vmatprep.subr.bf16.mxu0 0
      %543 = vmatpush1.bf16.msra.mxu0 %v358
      %544 = vmatprep.subr.bf16.mxu0 0
      %545 = vmatpush1.bf16.msra.mxu0 %v357
      %546 = vmatprep.subr.bf16.mxu0 0
      %547 = vmatpush1.bf16.msra.mxu0 %v356
      %548 = vmatprep.subr.bf16.mxu0 0
      %549 = vmatpush2.bf16.msra.mxu0 %v371
      %550 = vmatprep.subr.bf16.mxu0 0
      %551 = vmatpush2.bf16.msra.mxu0 %v370
      %552 = vmatprep.subr.bf16.mxu0 0
      %553 = vmatpush2.bf16.msra.mxu0 %v369
      %554 = vmatprep.subr.bf16.mxu0 0
      %555 = vmatpush2.bf16.msra.mxu0 %v368
      %556 = vmatprep.subr.bf16.mxu0 0
      %557 = vmatpush2.bf16.msra.mxu0 %v367
      %558 = vmatprep.subr.bf16.mxu0 0
      %559 = vmatpush2.bf16.msra.mxu0 %v366
      %560 = vmatprep.subr.bf16.mxu0 0
      %561 = vmatpush2.bf16.msra.mxu0 %v365
      %562 = vmatprep.subr.bf16.mxu0 0
      %563 = vmatpush2.bf16.msra.mxu0 %v364
      %564 = vmatprep.mubr.bf16.mxu0 %v469
      %565 = vmatmul.mubr.bf16.gmra.mxu0 %v468
      %v566 = vpop.f32.mrf.mxu0
      %v567 = vadd.f32 0.0, %v566
      %v568 = vpop.f32.mrf.mxu0
      %v569 = vpop.f32.mrf.mxu0
      %v570 = vadd.f32 0.0, %v569
      %v571 = vpop.f32.mrf.mxu0
      %572 = vmatprep.mubr.bf16.mxu0 %v471
      %573 = vmatmul.mubr.bf16.gmra.mxu0 %v470
      %v574 = vpop.f32.mrf.mxu0
      %v575 = vadd.f32 0.0, %v574
      %v576 = vpop.f32.mrf.mxu0
      %v577 = vpop.f32.mrf.mxu0
      %v578 = vadd.f32 0.0, %v577
      %v579 = vpop.f32.mrf.mxu0
      %580 = vmatprep.mubr.bf16.mxu0 %v473
      %581 = vmatmul.mubr.bf16.gmra.mxu0 %v472
      %v582 = vpop.f32.mrf.mxu0
      %v583 = vadd.f32 0.0, %v582
      %v584 = vpop.f32.mrf.mxu0
      %v585 = vpop.f32.mrf.mxu0
      %v586 = vadd.f32 0.0, %v585
      %v587 = vpop.f32.mrf.mxu0
      %588 = vmatprep.mubr.bf16.mxu0 %v475
      %589 = vmatmul.mubr.bf16.gmra.mxu0 %v474
      %v590 = vpop.f32.mrf.mxu0
      %v591 = vadd.f32 0.0, %v590
      %v592 = vpop.f32.mrf.mxu0
      %v593 = vpop.f32.mrf.mxu0
      %v594 = vadd.f32 0.0, %v593
      %v595 = vpop.f32.mrf.mxu0
      %596 = vmatprep.mubr.bf16.mxu0 %v477
      %597 = vmatmul.mubr.bf16.gmra.mxu0 %v476
      %v598 = vpop.f32.mrf.mxu0
      %v599 = vadd.f32 0.0, %v598
      %v600 = vpop.f32.mrf.mxu0
      %v601 = vpop.f32.mrf.mxu0
      %v602 = vadd.f32 0.0, %v601
      %v603 = vpop.f32.mrf.mxu0
      %604 = vmatprep.mubr.bf16.mxu0 %v479
      %605 = vmatmul.mubr.bf16.gmra.mxu0 %v478
      %v606 = vpop.f32.mrf.mxu0
      %v607 = vadd.f32 0.0, %v606
      %v608 = vpop.f32.mrf.mxu0
      %v609 = vpop.f32.mrf.mxu0
      %v610 = vadd.f32 0.0, %v609
      %v611 = vpop.f32.mrf.mxu0
      %612 = vmatprep.mubr.bf16.mxu0 %v481
      %613 = vmatmul.mubr.bf16.gmra.mxu0 %v480
      %v614 = vpop.f32.mrf.mxu0
      %v615 = vadd.f32 0.0, %v614
      %v616 = vpop.f32.mrf.mxu0
      %v617 = vpop.f32.mrf.mxu0
      %v618 = vadd.f32 0.0, %v617
      %v619 = vpop.f32.mrf.mxu0
      %620 = vmatprep.mubr.bf16.mxu0 %v483
      %621 = vmatmul.mubr.bf16.gmra.mxu0 %v482
      %v622 = vpop.f32.mrf.mxu0
      %v623 = vadd.f32 0.0, %v622
      %v624 = vpop.f32.mrf.mxu0
      %v625 = vpop.f32.mrf.mxu0
      %v626 = vadd.f32 0.0, %v625
      %v627 = vpop.f32.mrf.mxu0
      %628 = vmatprep.mubr.bf16.mxu0 %v485
      %629 = vmatmul.mubr.bf16.gmra.mxu0 %v484
      %v630 = vpop.f32.mrf.mxu0
      %v631 = vadd.f32 0.0, %v630
      %v632 = vpop.f32.mrf.mxu0
      %v633 = vpop.f32.mrf.mxu0
      %v634 = vadd.f32 0.0, %v633
      %v635 = vpop.f32.mrf.mxu0
      %636 = vmatprep.mubr.bf16.mxu0 %v487
      %637 = vmatmul.mubr.bf16.gmra.mxu0 %v486
      %v638 = vpop.f32.mrf.mxu0
      %v639 = vadd.f32 0.0, %v638
      %v640 = vpop.f32.mrf.mxu0
      %v641 = vpop.f32.mrf.mxu0
      %v642 = vadd.f32 0.0, %v641
      %v643 = vpop.f32.mrf.mxu0
      %644 = vmatprep.mubr.bf16.mxu0 %v489
      %645 = vmatmul.mubr.bf16.gmra.mxu0 %v488
      %v646 = vpop.f32.mrf.mxu0
      %v647 = vadd.f32 0.0, %v646
      %v648 = vpop.f32.mrf.mxu0
      %v649 = vpop.f32.mrf.mxu0
      %v650 = vadd.f32 0.0, %v649
      %v651 = vpop.f32.mrf.mxu0
      %652 = vmatprep.mubr.bf16.mxu0 %v491
      %653 = vmatmul.mubr.bf16.gmra.mxu0 %v490
      %v654 = vpop.f32.mrf.mxu0
      %v655 = vadd.f32 0.0, %v654
      %v656 = vpop.f32.mrf.mxu0
      %v657 = vpop.f32.mrf.mxu0
      %v658 = vadd.f32 0.0, %v657
      %v659 = vpop.f32.mrf.mxu0
      %660 = vmatprep.mubr.bf16.mxu0 %v493
      %661 = vmatmul.mubr.bf16.gmra.mxu0 %v492
      %v662 = vpop.f32.mrf.mxu0
      %v663 = vadd.f32 0.0, %v662
      %v664 = vpop.f32.mrf.mxu0
      %v665 = vpop.f32.mrf.mxu0
      %v666 = vadd.f32 0.0, %v665
      %v667 = vpop.f32.mrf.mxu0
      %668 = vmatprep.mubr.bf16.mxu0 %v495
      %669 = vmatmul.mubr.bf16.gmra.mxu0 %v494
      %v670 = vpop.f32.mrf.mxu0
      %v671 = vadd.f32 0.0, %v670
      %v672 = vpop.f32.mrf.mxu0
      %v673 = vpop.f32.mrf.mxu0
      %v674 = vadd.f32 0.0, %v673
      %v675 = vpop.f32.mrf.mxu0
      %676 = vmatprep.mubr.bf16.mxu0 %v497
      %677 = vmatmul.mubr.bf16.gmra.mxu0 %v496
      %v678 = vpop.f32.mrf.mxu0
      %v679 = vadd.f32 0.0, %v678
      %v680 = vpop.f32.mrf.mxu0
      %v681 = vpop.f32.mrf.mxu0
      %v682 = vadd.f32 0.0, %v681
      %v683 = vpop.f32.mrf.mxu0
      %684 = vmatprep.mubr.bf16.mxu0 %v499
      %685 = vmatmul.mubr.bf16.gmra.mxu0 %v498
      %v686 = vpop.f32.mrf.mxu0
      %v687 = vadd.f32 0.0, %v686
      %v688 = vpop.f32.mrf.mxu0
      %v689 = vpop.f32.mrf.mxu0
      %v690 = vadd.f32 0.0, %v689
      %v691 = vpop.f32.mrf.mxu0
      %692 = vdwg.mxu0
      %v693 = vmax.f32 %v567, 1.0
      %v694 = vmax.f32 %v570, 1.0
      %v695 = vmax.f32 %v575, 1.0
      %v696 = vmax.f32 %v578, 1.0
      %v697 = vmax.f32 %v583, 1.0
      %v698 = vmax.f32 %v586, 1.0
      %v699 = vmax.f32 %v591, 1.0
      %v700 = vmax.f32 %v594, 1.0
      %v701 = vmax.f32 %v599, 1.0
      %v702 = vmax.f32 %v602, 1.0
      %v703 = vmax.f32 %v607, 1.0
      %v704 = vmax.f32 %v610, 1.0
      %v705 = vmax.f32 %v615, 1.0
      %v706 = vmax.f32 %v618, 1.0
      %v707 = vmax.f32 %v623, 1.0
      %v708 = vmax.f32 %v626, 1.0
      %v709 = vmax.f32 %v631, 1.0
      %v710 = vmax.f32 %v634, 1.0
      %v711 = vmax.f32 %v639, 1.0
      %v712 = vmax.f32 %v642, 1.0
      %v713 = vmax.f32 %v647, 1.0
      %v714 = vmax.f32 %v650, 1.0
      %v715 = vmax.f32 %v655, 1.0
      %v716 = vmax.f32 %v658, 1.0
      %v717 = vmax.f32 %v663, 1.0
      %v718 = vmax.f32 %v666, 1.0
      %v719 = vmax.f32 %v671, 1.0
      %v720 = vmax.f32 %v674, 1.0
      %v721 = vmax.f32 %v679, 1.0
      %v722 = vmax.f32 %v682, 1.0
      %v723 = vmax.f32 %v687, 1.0
      %v724 = vmax.f32 %v690, 1.0
      %v725 = vrcp.pop %v693
      %v726 = vmul.f32 1.0, %v725
      %v727 = vrcp.pop %v694
      %v728 = vmul.f32 1.0, %v727
      %v729 = vrcp.pop %v695
      %v730 = vmul.f32 1.0, %v729
      %v731 = vrcp.pop %v696
      %v732 = vmul.f32 1.0, %v731
      %v733 = vrcp.pop %v697
      %v734 = vmul.f32 1.0, %v733
      %v735 = vrcp.pop %v698
      %v736 = vmul.f32 1.0, %v735
      %v737 = vrcp.pop %v699
      %v738 = vmul.f32 1.0, %v737
      %v739 = vrcp.pop %v700
      %v740 = vmul.f32 1.0, %v739
      %v741 = vrcp.pop %v701
      %v742 = vmul.f32 1.0, %v741
      %v743 = vrcp.pop %v702
      %v744 = vmul.f32 1.0, %v743
      %v745 = vrcp.pop %v703
      %v746 = vmul.f32 1.0, %v745
      %v747 = vrcp.pop %v704
      %v748 = vmul.f32 1.0, %v747
      %v749 = vrcp.pop %v705
      %v750 = vmul.f32 1.0, %v749
      %v751 = vrcp.pop %v706
      %v752 = vmul.f32 1.0, %v751
      %v753 = vrcp.pop %v707
      %v754 = vmul.f32 1.0, %v753
      %v755 = vrcp.pop %v708
      %v756 = vmul.f32 1.0, %v755
      %v757 = vrcp.pop %v709
      %v758 = vmul.f32 1.0, %v757
      %v759 = vrcp.pop %v710
      %v760 = vmul.f32 1.0, %v759
      %v761 = vrcp.pop %v711
      %v762 = vmul.f32 1.0, %v761
      %v763 = vrcp.pop %v712
      %v764 = vmul.f32 1.0, %v763
      %v765 = vrcp.pop %v713
      %v766 = vmul.f32 1.0, %v765
      %v767 = vrcp.pop %v714
      %v768 = vmul.f32 1.0, %v767
      %v769 = vrcp.pop %v715
      %v770 = vmul.f32 1.0, %v769
      %v771 = vrcp.pop %v716
      %v772 = vmul.f32 1.0, %v771
      %v773 = vrcp.pop %v717
      %v774 = vmul.f32 1.0, %v773
      %v775 = vrcp.pop %v718
      %v776 = vmul.f32 1.0, %v775
      %v777 = vrcp.pop %v719
      %v778 = vmul.f32 1.0, %v777
      %v779 = vrcp.pop %v720
      %v780 = vmul.f32 1.0, %v779
      %v781 = vrcp.pop %v721
      %v782 = vmul.f32 1.0, %v781
      %v783 = vrcp.pop %v722
      %v784 = vmul.f32 1.0, %v783
      %v785 = vrcp.pop %v723
      %v786 = vmul.f32 1.0, %v785
      %v787 = vrcp.pop %v724
      %v788 = vmul.f32 1.0, %v787
      %790 = vset.pattern.permute.xlu0 127
      %791 = vperm.xlu0 %790, %v726
      %v792 = vpop.permute.xlu0 %791
      %795 = vset.pattern.permute.xlu0 127
      %796 = vperm.xlu0 %795, %v728
      %v797 = vpop.permute.xlu0 %796
      %800 = vset.pattern.permute.xlu0 127
      %801 = vperm.xlu0 %800, %v730
      %v802 = vpop.permute.xlu0 %801
      %805 = vset.pattern.permute.xlu0 127
      %806 = vperm.xlu0 %805, %v732
      %v807 = vpop.permute.xlu0 %806
      %810 = vset.pattern.permute.xlu0 127
      %811 = vperm.xlu0 %810, %v734
      %v812 = vpop.permute.xlu0 %811
      %815 = vset.pattern.permute.xlu0 127
      %816 = vperm.xlu0 %815, %v736
      %v817 = vpop.permute.xlu0 %816
      %820 = vset.pattern.permute.xlu0 127
      %821 = vperm.xlu0 %820, %v738
      %v822 = vpop.permute.xlu0 %821
      %825 = vset.pattern.permute.xlu0 127
      %826 = vperm.xlu0 %825, %v740
      %v827 = vpop.permute.xlu0 %826
      %830 = vset.pattern.permute.xlu0 127
      %831 = vperm.xlu0 %830, %v742
      %v832 = vpop.permute.xlu0 %831
      %835 = vset.pattern.permute.xlu0 127
      %836 = vperm.xlu0 %835, %v744
      %v837 = vpop.permute.xlu0 %836
      %840 = vset.pattern.permute.xlu0 127
      %841 = vperm.xlu0 %840, %v746
      %v842 = vpop.permute.xlu0 %841
      %845 = vset.pattern.permute.xlu0 127
      %846 = vperm.xlu0 %845, %v748
      %v847 = vpop.permute.xlu0 %846
      %850 = vset.pattern.permute.xlu0 127
      %851 = vperm.xlu0 %850, %v750
      %v852 = vpop.permute.xlu0 %851
      %855 = vset.pattern.permute.xlu0 127
      %856 = vperm.xlu0 %855, %v752
      %v857 = vpop.permute.xlu0 %856
      %860 = vset.pattern.permute.xlu0 127
      %861 = vperm.xlu0 %860, %v754
      %v862 = vpop.permute.xlu0 %861
      %865 = vset.pattern.permute.xlu0 127
      %866 = vperm.xlu0 %865, %v756
      %v867 = vpop.permute.xlu0 %866
      %870 = vset.pattern.permute.xlu0 127
      %871 = vperm.xlu0 %870, %v758
      %v872 = vpop.permute.xlu0 %871
      %875 = vset.pattern.permute.xlu0 127
      %876 = vperm.xlu0 %875, %v760
      %v877 = vpop.permute.xlu0 %876
      %880 = vset.pattern.permute.xlu0 127
      %881 = vperm.xlu0 %880, %v762
      %v882 = vpop.permute.xlu0 %881
      %885 = vset.pattern.permute.xlu0 127
      %886 = vperm.xlu0 %885, %v764
      %v887 = vpop.permute.xlu0 %886
      %890 = vset.pattern.permute.xlu0 127
      %891 = vperm.xlu0 %890, %v766
      %v892 = vpop.permute.xlu0 %891
      %895 = vset.pattern.permute.xlu0 127
      %896 = vperm.xlu0 %895, %v768
      %v897 = vpop.permute.xlu0 %896
      %900 = vset.pattern.permute.xlu0 127
      %901 = vperm.xlu0 %900, %v770
      %v902 = vpop.permute.xlu0 %901
      %905 = vset.pattern.permute.xlu0 127
      %906 = vperm.xlu0 %905, %v772
      %v907 = vpop.permute.xlu0 %906
      %910 = vset.pattern.permute.xlu0 127
      %911 = vperm.xlu0 %910, %v774
      %v912 = vpop.permute.xlu0 %911
      %915 = vset.pattern.permute.xlu0 127
      %916 = vperm.xlu0 %915, %v776
      %v917 = vpop.permute.xlu0 %916
      %920 = vset.pattern.permute.xlu0 127
      %921 = vperm.xlu0 %920, %v778
      %v922 = vpop.permute.xlu0 %921
      %925 = vset.pattern.permute.xlu0 127
      %926 = vperm.xlu0 %925, %v780
      %v927 = vpop.permute.xlu0 %926
      %930 = vset.pattern.permute.xlu0 127
      %931 = vperm.xlu0 %930, %v782
      %v932 = vpop.permute.xlu0 %931
      %935 = vset.pattern.permute.xlu0 127
      %936 = vperm.xlu0 %935, %v784
      %v937 = vpop.permute.xlu0 %936
      %940 = vset.pattern.permute.xlu0 127
      %941 = vperm.xlu0 %940, %v786
      %v942 = vpop.permute.xlu0 %941
      %945 = vset.pattern.permute.xlu0 127
      %946 = vperm.xlu0 %945, %v788
      %v947 = vpop.permute.xlu0 %946
      %v949 = vmul.f32 %v567, %v792
      %v950 = vmul.f32 %v570, %v797
      %v951 = vmul.f32 %v575, %v802
      %v952 = vmul.f32 %v578, %v807
      %v953 = vmul.f32 %v583, %v812
      %v954 = vmul.f32 %v586, %v817
      %v955 = vmul.f32 %v591, %v822
      %v956 = vmul.f32 %v594, %v827
      %v957 = vmul.f32 %v599, %v832
      %v958 = vmul.f32 %v602, %v837
      %v959 = vmul.f32 %v607, %v842
      %v960 = vmul.f32 %v610, %v847
      %v961 = vmul.f32 %v615, %v852
      %v962 = vmul.f32 %v618, %v857
      %v963 = vmul.f32 %v623, %v862
      %v964 = vmul.f32 %v626, %v867
      %v965 = vmul.f32 %v631, %v872
      %v966 = vmul.f32 %v634, %v877
      %v967 = vmul.f32 %v639, %v882
      %v968 = vmul.f32 %v642, %v887
      %v969 = vmul.f32 %v647, %v892
      %v970 = vmul.f32 %v650, %v897
      %v971 = vmul.f32 %v655, %v902
      %v972 = vmul.f32 %v658, %v907
      %v973 = vmul.f32 %v663, %v912
      %v974 = vmul.f32 %v666, %v917
      %v975 = vmul.f32 %v671, %v922
      %v976 = vmul.f32 %v674, %v927
      %v977 = vmul.f32 %v679, %v932
      %v978 = vmul.f32 %v682, %v937
      %v979 = vmul.f32 %v687, %v942
      %v980 = vmul.f32 %v690, %v947
      %v981 = vld [vmem:[%s217] sm:$0xff]
      %v982 = vld [vmem:[%s217 + $0x8] sm:$0xff]
      %v983 = vld [vmem:[%s217 + $0x10] sm:$0xff]
      %v984 = vld [vmem:[%s217 + $0x18] sm:$0xff]
      %v985 = vld [vmem:[%s217 + $0x20] sm:$0xff]
      %v986 = vld [vmem:[%s217 + $0x28] sm:$0xff]
      %v987 = vld [vmem:[%s217 + $0x30] sm:$0xff]
      %v988 = vld [vmem:[%s217 + $0x38] sm:$0xff]
      %v989 = vld [vmem:[%s217 + $0x40] sm:$0xff]
      %v990 = vld [vmem:[%s217 + $0x48] sm:$0xff]
      %v991 = vld [vmem:[%s217 + $0x50] sm:$0xff]
      %v992 = vld [vmem:[%s217 + $0x58] sm:$0xff]
      %v993 = vld [vmem:[%s217 + $0x60] sm:$0xff]
      %v994 = vld [vmem:[%s217 + $0x68] sm:$0xff]
      %v995 = vld [vmem:[%s217 + $0x70] sm:$0xff]
      %v996 = vld [vmem:[%s217 + $0x78] sm:$0xff]
      %v997 = vld [vmem:[%s222] sm:$0xff]
      %v998 = vld [vmem:[%s222 + $0x8] sm:$0xff]
      %v999 = vld [vmem:[%s222 + $0x10] sm:$0xff]
      %v1000 = vld [vmem:[%s222 + $0x18] sm:$0xff]
      %v1001 = vld [vmem:[%s222 + $0x20] sm:$0xff]
      %v1002 = vld [vmem:[%s222 + $0x28] sm:$0xff]
      %v1003 = vld [vmem:[%s222 + $0x30] sm:$0xff]
      %v1004 = vld [vmem:[%s222 + $0x38] sm:$0xff]
      %v1005 = vld [vmem:[%s222 + $0x40] sm:$0xff]
      %v1006 = vld [vmem:[%s222 + $0x48] sm:$0xff]
      %v1007 = vld [vmem:[%s222 + $0x50] sm:$0xff]
      %v1008 = vld [vmem:[%s222 + $0x58] sm:$0xff]
      %v1009 = vld [vmem:[%s222 + $0x60] sm:$0xff]
      %v1010 = vld [vmem:[%s222 + $0x68] sm:$0xff]
      %v1011 = vld [vmem:[%s222 + $0x70] sm:$0xff]
      %v1012 = vld [vmem:[%s222 + $0x78] sm:$0xff]
      %1013 = vmatprep.subr.mxu0 0.0
      %1014 = vmatpush1.msra.mxu0 %v1012
      %1015 = vmatprep.subr.mxu0 0.0
      %1016 = vmatpush1.msra.mxu0 %v1011
      %1017 = vmatprep.subr.mxu0 0.0
      %1018 = vmatpush1.msra.mxu0 %v1010
      %1019 = vmatprep.subr.mxu0 0.0
      %1020 = vmatpush1.msra.mxu0 %v1009
      %1021 = vmatprep.subr.mxu0 0.0
      %1022 = vmatpush1.msra.mxu0 %v1008
      %1023 = vmatprep.subr.mxu0 0.0
      %1024 = vmatpush1.msra.mxu0 %v1007
      %1025 = vmatprep.subr.mxu0 0.0
      %1026 = vmatpush1.msra.mxu0 %v1006
      %1027 = vmatprep.subr.mxu0 0.0
      %1028 = vmatpush1.msra.mxu0 %v1005
      %1029 = vmatprep.subr.mxu0 0.0
      %1030 = vmatpush1.msra.mxu0 %v1004
      %1031 = vmatprep.subr.mxu0 0.0
      %1032 = vmatpush1.msra.mxu0 %v1003
      %1033 = vmatprep.subr.mxu0 0.0
      %1034 = vmatpush1.msra.mxu0 %v1002
      %1035 = vmatprep.subr.mxu0 0.0
      %1036 = vmatpush1.msra.mxu0 %v1001
      %1037 = vmatprep.subr.mxu0 0.0
      %1038 = vmatpush1.msra.mxu0 %v1000
      %1039 = vmatprep.subr.mxu0 0.0
      %1040 = vmatpush1.msra.mxu0 %v999
      %1041 = vmatprep.subr.mxu0 0.0
      %1042 = vmatpush1.msra.mxu0 %v998
      %1043 = vmatprep.subr.mxu0 0.0
      %1044 = vmatpush1.msra.mxu0 %v997
      %1045 = vmatprep.subr.mxu0 0.0
      %1046 = vmatpush2.msra.mxu0 0.0
      %1047 = vmatprep.subr.mxu0 0.0
      %1048 = vmatpush2.msra.mxu0 0.0
      %1049 = vmatprep.subr.mxu0 0.0
      %1050 = vmatpush2.msra.mxu0 0.0
      %1051 = vmatprep.subr.mxu0 0.0
      %1052 = vmatpush2.msra.mxu0 0.0
      %1053 = vmatprep.subr.mxu0 0.0
      %1054 = vmatpush2.msra.mxu0 0.0
      %1055 = vmatprep.subr.mxu0 0.0
      %1056 = vmatpush2.msra.mxu0 0.0
      %1057 = vmatprep.subr.mxu0 0.0
      %1058 = vmatpush2.msra.mxu0 0.0
      %1059 = vmatprep.subr.mxu0 0.0
      %1060 = vmatpush2.msra.mxu0 0.0
      %1061 = vmatprep.subr.mxu0 0.0
      %1062 = vmatpush2.msra.mxu0 0.0
      %1063 = vmatprep.subr.mxu0 0.0
      %1064 = vmatpush2.msra.mxu0 0.0
      %1065 = vmatprep.subr.mxu0 0.0
      %1066 = vmatpush2.msra.mxu0 0.0
      %1067 = vmatprep.subr.mxu0 0.0
      %1068 = vmatpush2.msra.mxu0 0.0
      %1069 = vmatprep.subr.mxu0 0.0
      %1070 = vmatpush2.msra.mxu0 0.0
      %1071 = vmatprep.subr.mxu0 0.0
      %1072 = vmatpush2.msra.mxu0 0.0
      %1073 = vmatprep.subr.mxu0 0.0
      %1074 = vmatpush2.msra.mxu0 0.0
      %1075 = vmatprep.subr.mxu0 0.0
      %1076 = vmatpush2.msra.mxu0 0.0
      %1077 = vmatprep.mubr.f32.mxu0 0.0
      %1078 = vmatmul.mubr.f32.gmra.mxu0 %v949
      %v1079 = vpop.f32.mrf.mxu0
      %v1080 = vadd.f32 0.0, %v1079
      %v1081 = vpop.f32.mrf.mxu0
      %1082 = vmatprep.mubr.f32.mxu0 0.0
      %1083 = vmatmul.mubr.f32.gmra.mxu0 %v950
      %v1084 = vpop.f32.mrf.mxu0
      %v1085 = vadd.f32 0.0, %v1084
      %v1086 = vpop.f32.mrf.mxu0
      %1087 = vmatprep.mubr.f32.mxu0 0.0
      %1088 = vmatmul.mubr.f32.gmra.mxu0 %v951
      %v1089 = vpop.f32.mrf.mxu0
      %v1090 = vadd.f32 0.0, %v1089
      %v1091 = vpop.f32.mrf.mxu0
      %1092 = vmatprep.mubr.f32.mxu0 0.0
      %1093 = vmatmul.mubr.f32.gmra.mxu0 %v952
      %v1094 = vpop.f32.mrf.mxu0
      %v1095 = vadd.f32 0.0, %v1094
      %v1096 = vpop.f32.mrf.mxu0
      %1097 = vmatprep.mubr.f32.mxu0 0.0
      %1098 = vmatmul.mubr.f32.gmra.mxu0 %v953
      %v1099 = vpop.f32.mrf.mxu0
      %v1100 = vadd.f32 0.0, %v1099
      %v1101 = vpop.f32.mrf.mxu0
      %1102 = vmatprep.mubr.f32.mxu0 0.0
      %1103 = vmatmul.mubr.f32.gmra.mxu0 %v954
      %v1104 = vpop.f32.mrf.mxu0
      %v1105 = vadd.f32 0.0, %v1104
      %v1106 = vpop.f32.mrf.mxu0
      %1107 = vmatprep.mubr.f32.mxu0 0.0
      %1108 = vmatmul.mubr.f32.gmra.mxu0 %v955
      %v1109 = vpop.f32.mrf.mxu0
      %v1110 = vadd.f32 0.0, %v1109
      %v1111 = vpop.f32.mrf.mxu0
      %1112 = vmatprep.mubr.f32.mxu0 0.0
      %1113 = vmatmul.mubr.f32.gmra.mxu0 %v956
      %v1114 = vpop.f32.mrf.mxu0
      %v1115 = vadd.f32 0.0, %v1114
      %v1116 = vpop.f32.mrf.mxu0
      %1117 = vmatprep.mubr.f32.mxu0 0.0
      %1118 = vmatmul.mubr.f32.gmra.mxu0 %v957
      %v1119 = vpop.f32.mrf.mxu0
      %v1120 = vadd.f32 0.0, %v1119
      %v1121 = vpop.f32.mrf.mxu0
      %1122 = vmatprep.mubr.f32.mxu0 0.0
      %1123 = vmatmul.mubr.f32.gmra.mxu0 %v958
      %v1124 = vpop.f32.mrf.mxu0
      %v1125 = vadd.f32 0.0, %v1124
      %v1126 = vpop.f32.mrf.mxu0
      %1127 = vmatprep.mubr.f32.mxu0 0.0
      %1128 = vmatmul.mubr.f32.gmra.mxu0 %v959
      %v1129 = vpop.f32.mrf.mxu0
      %v1130 = vadd.f32 0.0, %v1129
      %v1131 = vpop.f32.mrf.mxu0
      %1132 = vmatprep.mubr.f32.mxu0 0.0
      %1133 = vmatmul.mubr.f32.gmra.mxu0 %v960
      %v1134 = vpop.f32.mrf.mxu0
      %v1135 = vadd.f32 0.0, %v1134
      %v1136 = vpop.f32.mrf.mxu0
      %1137 = vmatprep.mubr.f32.mxu0 0.0
      %1138 = vmatmul.mubr.f32.gmra.mxu0 %v961
      %v1139 = vpop.f32.mrf.mxu0
      %v1140 = vadd.f32 0.0, %v1139
      %v1141 = vpop.f32.mrf.mxu0
      %1142 = vmatprep.mubr.f32.mxu0 0.0
      %1143 = vmatmul.mubr.f32.gmra.mxu0 %v962
      %v1144 = vpop.f32.mrf.mxu0
      %v1145 = vadd.f32 0.0, %v1144
      %v1146 = vpop.f32.mrf.mxu0
      %1147 = vmatprep.mubr.f32.mxu0 0.0
      %1148 = vmatmul.mubr.f32.gmra.mxu0 %v963
      %v1149 = vpop.f32.mrf.mxu0
      %v1150 = vadd.f32 0.0, %v1149
      %v1151 = vpop.f32.mrf.mxu0
      %1152 = vmatprep.mubr.f32.mxu0 0.0
      %1153 = vmatmul.mubr.f32.gmra.mxu0 %v964
      %v1154 = vpop.f32.mrf.mxu0
      %v1155 = vadd.f32 0.0, %v1154
      %v1156 = vpop.f32.mrf.mxu0
      %1157 = vmatprep.mubr.f32.mxu0 0.0
      %1158 = vmatmul.mubr.f32.gmra.mxu0 %v965
      %v1159 = vpop.f32.mrf.mxu0
      %v1160 = vadd.f32 0.0, %v1159
      %v1161 = vpop.f32.mrf.mxu0
      %1162 = vmatprep.mubr.f32.mxu0 0.0
      %1163 = vmatmul.mubr.f32.gmra.mxu0 %v966
      %v1164 = vpop.f32.mrf.mxu0
      %v1165 = vadd.f32 0.0, %v1164
      %v1166 = vpop.f32.mrf.mxu0
      %1167 = vmatprep.mubr.f32.mxu0 0.0
      %1168 = vmatmul.mubr.f32.gmra.mxu0 %v967
      %v1169 = vpop.f32.mrf.mxu0
      %v1170 = vadd.f32 0.0, %v1169
      %v1171 = vpop.f32.mrf.mxu0
      %1172 = vmatprep.mubr.f32.mxu0 0.0
      %1173 = vmatmul.mubr.f32.gmra.mxu0 %v968
      %v1174 = vpop.f32.mrf.mxu0
      %v1175 = vadd.f32 0.0, %v1174
      %v1176 = vpop.f32.mrf.mxu0
      %1177 = vmatprep.mubr.f32.mxu0 0.0
      %1178 = vmatmul.mubr.f32.gmra.mxu0 %v969
      %v1179 = vpop.f32.mrf.mxu0
      %v1180 = vadd.f32 0.0, %v1179
      %v1181 = vpop.f32.mrf.mxu0
      %1182 = vmatprep.mubr.f32.mxu0 0.0
      %1183 = vmatmul.mubr.f32.gmra.mxu0 %v970
      %v1184 = vpop.f32.mrf.mxu0
      %v1185 = vadd.f32 0.0, %v1184
      %v1186 = vpop.f32.mrf.mxu0
      %1187 = vmatprep.mubr.f32.mxu0 0.0
      %1188 = vmatmul.mubr.f32.gmra.mxu0 %v971
      %v1189 = vpop.f32.mrf.mxu0
      %v1190 = vadd.f32 0.0, %v1189
      %v1191 = vpop.f32.mrf.mxu0
      %1192 = vmatprep.mubr.f32.mxu0 0.0
      %1193 = vmatmul.mubr.f32.gmra.mxu0 %v972
      %v1194 = vpop.f32.mrf.mxu0
      %v1195 = vadd.f32 0.0, %v1194
      %v1196 = vpop.f32.mrf.mxu0
      %1197 = vmatprep.mubr.f32.mxu0 0.0
      %1198 = vmatmul.mubr.f32.gmra.mxu0 %v973
      %v1199 = vpop.f32.mrf.mxu0
      %v1200 = vadd.f32 0.0, %v1199
      %v1201 = vpop.f32.mrf.mxu0
      %1202 = vmatprep.mubr.f32.mxu0 0.0
      %1203 = vmatmul.mubr.f32.gmra.mxu0 %v974
      %v1204 = vpop.f32.mrf.mxu0
      %v1205 = vadd.f32 0.0, %v1204
      %v1206 = vpop.f32.mrf.mxu0
      %1207 = vmatprep.mubr.f32.mxu0 0.0
      %1208 = vmatmul.mubr.f32.gmra.mxu0 %v975
      %v1209 = vpop.f32.mrf.mxu0
      %v1210 = vadd.f32 0.0, %v1209
      %v1211 = vpop.f32.mrf.mxu0
      %1212 = vmatprep.mubr.f32.mxu0 0.0
      %1213 = vmatmul.mubr.f32.gmra.mxu0 %v976
      %v1214 = vpop.f32.mrf.mxu0
      %v1215 = vadd.f32 0.0, %v1214
      %v1216 = vpop.f32.mrf.mxu0
      %1217 = vmatprep.mubr.f32.mxu0 0.0
      %1218 = vmatmul.mubr.f32.gmra.mxu0 %v977
      %v1219 = vpop.f32.mrf.mxu0
      %v1220 = vadd.f32 0.0, %v1219
      %v1221 = vpop.f32.mrf.mxu0
      %1222 = vmatprep.mubr.f32.mxu0 0.0
      %1223 = vmatmul.mubr.f32.gmra.mxu0 %v978
      %v1224 = vpop.f32.mrf.mxu0
      %v1225 = vadd.f32 0.0, %v1224
      %v1226 = vpop.f32.mrf.mxu0
      %1227 = vmatprep.mubr.f32.mxu0 0.0
      %1228 = vmatmul.mubr.f32.gmra.mxu0 %v979
      %v1229 = vpop.f32.mrf.mxu0
      %v1230 = vadd.f32 0.0, %v1229
      %v1231 = vpop.f32.mrf.mxu0
      %1232 = vmatprep.mubr.f32.mxu0 0.0
      %1233 = vmatmul.mubr.f32.gmra.mxu0 %v980
      %v1234 = vpop.f32.mrf.mxu0
      %v1235 = vadd.f32 0.0, %v1234
      %v1236 = vpop.f32.mrf.mxu0
      %1237 = vdwg.mxu0
      %1238 = vmatprep.subr.mxu0 0.0
      %1239 = vmatpush1.msra.mxu0 %v996
      %1240 = vmatprep.subr.mxu0 0.0
      %1241 = vmatpush1.msra.mxu0 %v995
      %1242 = vmatprep.subr.mxu0 0.0
      %1243 = vmatpush1.msra.mxu0 %v994
      %1244 = vmatprep.subr.mxu0 0.0
      %1245 = vmatpush1.msra.mxu0 %v993
      %1246 = vmatprep.subr.mxu0 0.0
      %1247 = vmatpush1.msra.mxu0 %v992
      %1248 = vmatprep.subr.mxu0 0.0
      %1249 = vmatpush1.msra.mxu0 %v991
      %1250 = vmatprep.subr.mxu0 0.0
      %1251 = vmatpush1.msra.mxu0 %v990
      %1252 = vmatprep.subr.mxu0 0.0
      %1253 = vmatpush1.msra.mxu0 %v989
      %1254 = vmatprep.subr.mxu0 0.0
      %1255 = vmatpush1.msra.mxu0 %v988
      %1256 = vmatprep.subr.mxu0 0.0
      %1257 = vmatpush1.msra.mxu0 %v987
      %1258 = vmatprep.subr.mxu0 0.0
      %1259 = vmatpush1.msra.mxu0 %v986
      %1260 = vmatprep.subr.mxu0 0.0
      %1261 = vmatpush1.msra.mxu0 %v985
      %1262 = vmatprep.subr.mxu0 0.0
      %1263 = vmatpush1.msra.mxu0 %v984
      %1264 = vmatprep.subr.mxu0 0.0
      %1265 = vmatpush1.msra.mxu0 %v983
      %1266 = vmatprep.subr.mxu0 0.0
      %1267 = vmatpush1.msra.mxu0 %v982
      %1268 = vmatprep.subr.mxu0 0.0
      %1269 = vmatpush1.msra.mxu0 %v981
      %1270 = vmatprep.subr.mxu0 0.0
      %1271 = vmatpush2.msra.mxu0 0.0
      %1272 = vmatprep.subr.mxu0 0.0
      %1273 = vmatpush2.msra.mxu0 0.0
      %1274 = vmatprep.subr.mxu0 0.0
      %1275 = vmatpush2.msra.mxu0 0.0
      %1276 = vmatprep.subr.mxu0 0.0
      %1277 = vmatpush2.msra.mxu0 0.0
      %1278 = vmatprep.subr.mxu0 0.0
      %1279 = vmatpush2.msra.mxu0 0.0
      %1280 = vmatprep.subr.mxu0 0.0
      %1281 = vmatpush2.msra.mxu0 0.0
      %1282 = vmatprep.subr.mxu0 0.0
      %1283 = vmatpush2.msra.mxu0 0.0
      %1284 = vmatprep.subr.mxu0 0.0
      %1285 = vmatpush2.msra.mxu0 0.0
      %1286 = vmatprep.subr.mxu0 0.0
      %1287 = vmatpush2.msra.mxu0 0.0
      %1288 = vmatprep.subr.mxu0 0.0
      %1289 = vmatpush2.msra.mxu0 0.0
      %1290 = vmatprep.subr.mxu0 0.0
      %1291 = vmatpush2.msra.mxu0 0.0
      %1292 = vmatprep.subr.mxu0 0.0
      %1293 = vmatpush2.msra.mxu0 0.0
      %1294 = vmatprep.subr.mxu0 0.0
      %1295 = vmatpush2.msra.mxu0 0.0
      %1296 = vmatprep.subr.mxu0 0.0
      %1297 = vmatpush2.msra.mxu0 0.0
      %1298 = vmatprep.subr.mxu0 0.0
      %1299 = vmatpush2.msra.mxu0 0.0
      %1300 = vmatprep.subr.mxu0 0.0
      %1301 = vmatpush2.msra.mxu0 0.0
      %1302 = vmatprep.mubr.f32.mxu0 0.0
      %1303 = vmatmul.mubr.f32.gmra.mxu0 %v292
      %v1304 = vpop.f32.mrf.mxu0
      %v1305 = vadd.f32 %v1080, %v1304
      %v1306 = vpop.f32.mrf.mxu0
      %1307 = vmatprep.mubr.f32.mxu0 0.0
      %1308 = vmatmul.mubr.f32.gmra.mxu0 %v293
      %v1309 = vpop.f32.mrf.mxu0
      %v1310 = vadd.f32 %v1085, %v1309
      %v1311 = vpop.f32.mrf.mxu0
      %1312 = vmatprep.mubr.f32.mxu0 0.0
      %1313 = vmatmul.mubr.f32.gmra.mxu0 %v294
      %v1314 = vpop.f32.mrf.mxu0
      %v1315 = vadd.f32 %v1090, %v1314
      %v1316 = vpop.f32.mrf.mxu0
      %1317 = vmatprep.mubr.f32.mxu0 0.0
      %1318 = vmatmul.mubr.f32.gmra.mxu0 %v295
      %v1319 = vpop.f32.mrf.mxu0
      %v1320 = vadd.f32 %v1095, %v1319
      %v1321 = vpop.f32.mrf.mxu0
      %1322 = vmatprep.mubr.f32.mxu0 0.0
      %1323 = vmatmul.mubr.f32.gmra.mxu0 %v296
      %v1324 = vpop.f32.mrf.mxu0
      %v1325 = vadd.f32 %v1100, %v1324
      %v1326 = vpop.f32.mrf.mxu0
      %1327 = vmatprep.mubr.f32.mxu0 0.0
      %1328 = vmatmul.mubr.f32.gmra.mxu0 %v297
      %v1329 = vpop.f32.mrf.mxu0
      %v1330 = vadd.f32 %v1105, %v1329
      %v1331 = vpop.f32.mrf.mxu0
      %1332 = vmatprep.mubr.f32.mxu0 0.0
      %1333 = vmatmul.mubr.f32.gmra.mxu0 %v298
      %v1334 = vpop.f32.mrf.mxu0
      %v1335 = vadd.f32 %v1110, %v1334
      %v1336 = vpop.f32.mrf.mxu0
      %1337 = vmatprep.mubr.f32.mxu0 0.0
      %1338 = vmatmul.mubr.f32.gmra.mxu0 %v299
      %v1339 = vpop.f32.mrf.mxu0
      %v1340 = vadd.f32 %v1115, %v1339
      %v1341 = vpop.f32.mrf.mxu0
      %1342 = vmatprep.mubr.f32.mxu0 0.0
      %1343 = vmatmul.mubr.f32.gmra.mxu0 %v300
      %v1344 = vpop.f32.mrf.mxu0
      %v1345 = vadd.f32 %v1120, %v1344
      %v1346 = vpop.f32.mrf.mxu0
      %1347 = vmatprep.mubr.f32.mxu0 0.0
      %1348 = vmatmul.mubr.f32.gmra.mxu0 %v301
      %v1349 = vpop.f32.mrf.mxu0
      %v1350 = vadd.f32 %v1125, %v1349
      %v1351 = vpop.f32.mrf.mxu0
      %1352 = vmatprep.mubr.f32.mxu0 0.0
      %1353 = vmatmul.mubr.f32.gmra.mxu0 %v302
      %v1354 = vpop.f32.mrf.mxu0
      %v1355 = vadd.f32 %v1130, %v1354
      %v1356 = vpop.f32.mrf.mxu0
      %1357 = vmatprep.mubr.f32.mxu0 0.0
      %1358 = vmatmul.mubr.f32.gmra.mxu0 %v303
      %v1359 = vpop.f32.mrf.mxu0
      %v1360 = vadd.f32 %v1135, %v1359
      %v1361 = vpop.f32.mrf.mxu0
      %1362 = vmatprep.mubr.f32.mxu0 0.0
      %1363 = vmatmul.mubr.f32.gmra.mxu0 %v304
      %v1364 = vpop.f32.mrf.mxu0
      %v1365 = vadd.f32 %v1140, %v1364
      %v1366 = vpop.f32.mrf.mxu0
      %1367 = vmatprep.mubr.f32.mxu0 0.0
      %1368 = vmatmul.mubr.f32.gmra.mxu0 %v305
      %v1369 = vpop.f32.mrf.mxu0
      %v1370 = vadd.f32 %v1145, %v1369
      %v1371 = vpop.f32.mrf.mxu0
      %1372 = vmatprep.mubr.f32.mxu0 0.0
      %1373 = vmatmul.mubr.f32.gmra.mxu0 %v306
      %v1374 = vpop.f32.mrf.mxu0
      %v1375 = vadd.f32 %v1150, %v1374
      %v1376 = vpop.f32.mrf.mxu0
      %1377 = vmatprep.mubr.f32.mxu0 0.0
      %1378 = vmatmul.mubr.f32.gmra.mxu0 %v307
      %v1379 = vpop.f32.mrf.mxu0
      %v1380 = vadd.f32 %v1155, %v1379
      %v1381 = vpop.f32.mrf.mxu0
      %1382 = vmatprep.mubr.f32.mxu0 0.0
      %1383 = vmatmul.mubr.f32.gmra.mxu0 %v308
      %v1384 = vpop.f32.mrf.mxu0
      %v1385 = vadd.f32 %v1160, %v1384
      %v1386 = vpop.f32.mrf.mxu0
      %1387 = vmatprep.mubr.f32.mxu0 0.0
      %1388 = vmatmul.mubr.f32.gmra.mxu0 %v309
      %v1389 = vpop.f32.mrf.mxu0
      %v1390 = vadd.f32 %v1165, %v1389
      %v1391 = vpop.f32.mrf.mxu0
      %1392 = vmatprep.mubr.f32.mxu0 0.0
      %1393 = vmatmul.mubr.f32.gmra.mxu0 %v310
      %v1394 = vpop.f32.mrf.mxu0
      %v1395 = vadd.f32 %v1170, %v1394
      %v1396 = vpop.f32.mrf.mxu0
      %1397 = vmatprep.mubr.f32.mxu0 0.0
      %1398 = vmatmul.mubr.f32.gmra.mxu0 %v311
      %v1399 = vpop.f32.mrf.mxu0
      %v1400 = vadd.f32 %v1175, %v1399
      %v1401 = vpop.f32.mrf.mxu0
      %1402 = vmatprep.mubr.f32.mxu0 0.0
      %1403 = vmatmul.mubr.f32.gmra.mxu0 %v312
      %v1404 = vpop.f32.mrf.mxu0
      %v1405 = vadd.f32 %v1180, %v1404
      %v1406 = vpop.f32.mrf.mxu0
      %1407 = vmatprep.mubr.f32.mxu0 0.0
      %1408 = vmatmul.mubr.f32.gmra.mxu0 %v313
      %v1409 = vpop.f32.mrf.mxu0
      %v1410 = vadd.f32 %v1185, %v1409
      %v1411 = vpop.f32.mrf.mxu0
      %1412 = vmatprep.mubr.f32.mxu0 0.0
      %1413 = vmatmul.mubr.f32.gmra.mxu0 %v314
      %v1414 = vpop.f32.mrf.mxu0
      %v1415 = vadd.f32 %v1190, %v1414
      %v1416 = vpop.f32.mrf.mxu0
      %1417 = vmatprep.mubr.f32.mxu0 0.0
      %1418 = vmatmul.mubr.f32.gmra.mxu0 %v315
      %v1419 = vpop.f32.mrf.mxu0
      %v1420 = vadd.f32 %v1195, %v1419
      %v1421 = vpop.f32.mrf.mxu0
      %1422 = vmatprep.mubr.f32.mxu0 0.0
      %1423 = vmatmul.mubr.f32.gmra.mxu0 %v316
      %v1424 = vpop.f32.mrf.mxu0
      %v1425 = vadd.f32 %v1200, %v1424
      %v1426 = vpop.f32.mrf.mxu0
      %1427 = vmatprep.mubr.f32.mxu0 0.0
      %1428 = vmatmul.mubr.f32.gmra.mxu0 %v317
      %v1429 = vpop.f32.mrf.mxu0
      %v1430 = vadd.f32 %v1205, %v1429
      %v1431 = vpop.f32.mrf.mxu0
      %1432 = vmatprep.mubr.f32.mxu0 0.0
      %1433 = vmatmul.mubr.f32.gmra.mxu0 %v318
      %v1434 = vpop.f32.mrf.mxu0
      %v1435 = vadd.f32 %v1210, %v1434
      %v1436 = vpop.f32.mrf.mxu0
      %1437 = vmatprep.mubr.f32.mxu0 0.0
      %1438 = vmatmul.mubr.f32.gmra.mxu0 %v319
      %v1439 = vpop.f32.mrf.mxu0
      %v1440 = vadd.f32 %v1215, %v1439
      %v1441 = vpop.f32.mrf.mxu0
      %1442 = vmatprep.mubr.f32.mxu0 0.0
      %1443 = vmatmul.mubr.f32.gmra.mxu0 %v320
      %v1444 = vpop.f32.mrf.mxu0
      %v1445 = vadd.f32 %v1220, %v1444
      %v1446 = vpop.f32.mrf.mxu0
      %1447 = vmatprep.mubr.f32.mxu0 0.0
      %1448 = vmatmul.mubr.f32.gmra.mxu0 %v321
      %v1449 = vpop.f32.mrf.mxu0
      %v1450 = vadd.f32 %v1225, %v1449
      %v1451 = vpop.f32.mrf.mxu0
      %1452 = vmatprep.mubr.f32.mxu0 0.0
      %1453 = vmatmul.mubr.f32.gmra.mxu0 %v322
      %v1454 = vpop.f32.mrf.mxu0
      %v1455 = vadd.f32 %v1230, %v1454
      %v1456 = vpop.f32.mrf.mxu0
      %1457 = vmatprep.mubr.f32.mxu0 0.0
      %1458 = vmatmul.mubr.f32.gmra.mxu0 %v323
      %v1459 = vpop.f32.mrf.mxu0
      %v1460 = vadd.f32 %v1235, %v1459
      %v1461 = vpop.f32.mrf.mxu0
      %1462 = vdwg.mxu0
      %p1463 = scmp.eq.s32.totalorder %s15, 2
      // Predicated region
      $region41: #{large_baseline_graphsage_cluster_forward.1} parent=35 // pred_check
        %p1464 = pneg %p1463
      $region42: #{large_baseline_graphsage_cluster_forward.1} parent=35 // pred_check_branch
        %1466 = sbr.rel (%p1464) target = $region44
      $region43: #{large_baseline_graphsage_cluster_forward.1} parent=35 // pred_region
        %1467 = vst [vmem:[%s4] sm:$0xff] %v1305
        %1468 = vst [vmem:[%s4 + $0x8] sm:$0xff] %v1310
        %1469 = vst [vmem:[%s4 + $0x10] sm:$0xff] %v1315
        %1470 = vst [vmem:[%s4 + $0x18] sm:$0xff] %v1320
        %1471 = vst [vmem:[%s4 + $0x20] sm:$0xff] %v1325
        %1472 = vst [vmem:[%s4 + $0x28] sm:$0xff] %v1330
        %1473 = vst [vmem:[%s4 + $0x30] sm:$0xff] %v1335
        %1474 = vst [vmem:[%s4 + $0x38] sm:$0xff] %v1340
        %1475 = vst [vmem:[%s4 + $0x40] sm:$0xff] %v1345
        %1476 = vst [vmem:[%s4 + $0x48] sm:$0xff] %v1350
        %1477 = vst [vmem:[%s4 + $0x50] sm:$0xff] %v1355
        %1478 = vst [vmem:[%s4 + $0x58] sm:$0xff] %v1360
        %1479 = vst [vmem:[%s4 + $0x60] sm:$0xff] %v1365
        %1480 = vst [vmem:[%s4 + $0x68] sm:$0xff] %v1370
        %1481 = vst [vmem:[%s4 + $0x70] sm:$0xff] %v1375
        %1482 = vst [vmem:[%s4 + $0x78] sm:$0xff] %v1380
        %1483 = vst [vmem:[%s4 + $0x80] sm:$0xff] %v1385
        %1484 = vst [vmem:[%s4 + $0x88] sm:$0xff] %v1390
        %1485 = vst [vmem:[%s4 + $0x90] sm:$0xff] %v1395
        %1486 = vst [vmem:[%s4 + $0x98] sm:$0xff] %v1400
        %1487 = vst [vmem:[%s4 + $0xa0] sm:$0xff] %v1405
        %1488 = vst [vmem:[%s4 + $0xa8] sm:$0xff] %v1410
        %1489 = vst [vmem:[%s4 + $0xb0] sm:$0xff] %v1415
        %1490 = vst [vmem:[%s4 + $0xb8] sm:$0xff] %v1420
        %1491 = vst [vmem:[%s4 + $0xc0] sm:$0xff] %v1425
        %1492 = vst [vmem:[%s4 + $0xc8] sm:$0xff] %v1430
        %1493 = vst [vmem:[%s4 + $0xd0] sm:$0xff] %v1435
        %1494 = vst [vmem:[%s4 + $0xd8] sm:$0xff] %v1440
        %1495 = vst [vmem:[%s4 + $0xe0] sm:$0xff] %v1445
        %1496 = vst [vmem:[%s4 + $0xe8] sm:$0xff] %v1450
        %1497 = vst [vmem:[%s4 + $0xf0] sm:$0xff] %v1455
        %1498 = vst [vmem:[%s4 + $0xf8] sm:$0xff] %v1460
      $region44: #{large_baseline_graphsage_cluster_forward.1} parent=35 // pred_fallthru
        _
      %p1499 = scmp.lt.s32.totalorder %s15, 2
      // Predicated region
      $region45: #{large_baseline_graphsage_cluster_forward.1} parent=35 // pred_check
        %p1500 = pneg %p1499
      $region46: #{large_baseline_graphsage_cluster_forward.1} parent=35 // pred_check_branch
        %1502 = sbr.rel (%p1500) target = $region48
      $region47: #{large_baseline_graphsage_cluster_forward.1} parent=35 // pred_region
        %v1503 = vmax.f32 %v1305, 0.0
        %v1504 = vmax.f32 %v1310, 0.0
        %v1505 = vmax.f32 %v1315, 0.0
        %v1506 = vmax.f32 %v1320, 0.0
        %v1507 = vmax.f32 %v1325, 0.0
        %v1508 = vmax.f32 %v1330, 0.0
        %v1509 = vmax.f32 %v1335, 0.0
        %v1510 = vmax.f32 %v1340, 0.0
        %v1511 = vmax.f32 %v1345, 0.0
        %v1512 = vmax.f32 %v1350, 0.0
        %v1513 = vmax.f32 %v1355, 0.0
        %v1514 = vmax.f32 %v1360, 0.0
        %v1515 = vmax.f32 %v1365, 0.0
        %v1516 = vmax.f32 %v1370, 0.0
        %v1517 = vmax.f32 %v1375, 0.0
        %v1518 = vmax.f32 %v1380, 0.0
        %v1519 = vmax.f32 %v1385, 0.0
        %v1520 = vmax.f32 %v1390, 0.0
        %v1521 = vmax.f32 %v1395, 0.0
        %v1522 = vmax.f32 %v1400, 0.0
        %v1523 = vmax.f32 %v1405, 0.0
        %v1524 = vmax.f32 %v1410, 0.0
        %v1525 = vmax.f32 %v1415, 0.0
        %v1526 = vmax.f32 %v1420, 0.0
        %v1527 = vmax.f32 %v1425, 0.0
        %v1528 = vmax.f32 %v1430, 0.0
        %v1529 = vmax.f32 %v1435, 0.0
        %v1530 = vmax.f32 %v1440, 0.0
        %v1531 = vmax.f32 %v1445, 0.0
        %v1532 = vmax.f32 %v1450, 0.0
        %v1533 = vmax.f32 %v1455, 0.0
        %v1534 = vmax.f32 %v1460, 0.0
        %1535 = vst [vmem:[#allocation2] sm:$0xff] %v1503
        %1536 = vst [vmem:[#allocation2 + $0x8] sm:$0xff] %v1504
        %1537 = vst [vmem:[#allocation2 + $0x10] sm:$0xff] %v1505
        %1538 = vst [vmem:[#allocation2 + $0x18] sm:$0xff] %v1506
        %1539 = vst [vmem:[#allocation2 + $0x20] sm:$0xff] %v1507
        %1540 = vst [vmem:[#allocation2 + $0x28] sm:$0xff] %v1508
        %1541 = vst [vmem:[#allocation2 + $0x30] sm:$0xff] %v1509
        %1542 = vst [vmem:[#allocation2 + $0x38] sm:$0xff] %v1510
        %1543 = vst [vmem:[#allocation2 + $0x40] sm:$0xff] %v1511
        %1544 = vst [vmem:[#allocation2 + $0x48] sm:$0xff] %v1512
        %1545 = vst [vmem:[#allocation2 + $0x50] sm:$0xff] %v1513
        %1546 = vst [vmem:[#allocation2 + $0x58] sm:$0xff] %v1514
        %1547 = vst [vmem:[#allocation2 + $0x60] sm:$0xff] %v1515
        %1548 = vst [vmem:[#allocation2 + $0x68] sm:$0xff] %v1516
        %1549 = vst [vmem:[#allocation2 + $0x70] sm:$0xff] %v1517
        %1550 = vst [vmem:[#allocation2 + $0x78] sm:$0xff] %v1518
        %1551 = vst [vmem:[#allocation2 + $0x80] sm:$0xff] %v1519
        %1552 = vst [vmem:[#allocation2 + $0x88] sm:$0xff] %v1520
        %1553 = vst [vmem:[#allocation2 + $0x90] sm:$0xff] %v1521
        %1554 = vst [vmem:[#allocation2 + $0x98] sm:$0xff] %v1522
        %1555 = vst [vmem:[#allocation2 + $0xa0] sm:$0xff] %v1523
        %1556 = vst [vmem:[#allocation2 + $0xa8] sm:$0xff] %v1524
        %1557 = vst [vmem:[#allocation2 + $0xb0] sm:$0xff] %v1525
        %1558 = vst [vmem:[#allocation2 + $0xb8] sm:$0xff] %v1526
        %1559 = vst [vmem:[#allocation2 + $0xc0] sm:$0xff] %v1527
        %1560 = vst [vmem:[#allocation2 + $0xc8] sm:$0xff] %v1528
        %1561 = vst [vmem:[#allocation2 + $0xd0] sm:$0xff] %v1529
        %1562 = vst [vmem:[#allocation2 + $0xd8] sm:$0xff] %v1530
        %1563 = vst [vmem:[#allocation2 + $0xe0] sm:$0xff] %v1531
        %1564 = vst [vmem:[#allocation2 + $0xe8] sm:$0xff] %v1532
        %1565 = vst [vmem:[#allocation2 + $0xf0] sm:$0xff] %v1533
        %1566 = vst [vmem:[#allocation2 + $0xf8] sm:$0xff] %v1534
      $region48: #{large_baseline_graphsage_cluster_forward.1} parent=35 // pred_fallthru
        _
      // Predicated region
      $region49: #{large_baseline_graphsage_cluster_forward.1} parent=35 // pred_check
        %p1567 = pneg %p127
      $region50: #{large_baseline_graphsage_cluster_forward.1} parent=35 // pred_check_branch
        %1569 = sbr.rel (%p1567) target = $region52
      $region51: #{large_baseline_graphsage_cluster_forward.1} parent=35 // pred_region
        _
      $region52: #{large_baseline_graphsage_cluster_forward.1} parent=35 // pred_fallthru
        _
      // Predicated region
      $region53: #{large_baseline_graphsage_cluster_forward.1} parent=35 // pred_check
        %p1570 = pneg %p127
      $region54: #{large_baseline_graphsage_cluster_forward.1} parent=35 // pred_check_branch
        %1572 = sbr.rel (%p1570) target = $region56
      $region55: #{large_baseline_graphsage_cluster_forward.1} parent=35 // pred_region
        _
      $region56: #{large_baseline_graphsage_cluster_forward.1} parent=35 // pred_fallthru
        _
    $region36: #{large_baseline_graphsage_cluster_forward.1} parent=5 // pred_fallthru
      _
    %p1573 = scmp.le.s32.totalorder 2, %s10
    // Predicated region
    $region57: #{large_baseline_graphsage_cluster_forward.1} parent=5 // pred_check
      %p1574 = pneg %p1573
    $region58: #{large_baseline_graphsage_cluster_forward.1} parent=5 // pred_check_branch
      %1576 = sbr.rel (%p1574) target = $region60
    $region59: #{large_baseline_graphsage_cluster_forward.1} parent=5 // pred_region
      %s1577 = ssub.s32 %s10, 2
    $region60: #{large_baseline_graphsage_cluster_forward.1} parent=5 // pred_fallthru
      _
  $region6: #{large_baseline_graphsage_cluster_forward.1} parent=0 // loop_footer
    %s14 = sadd.s32 1, %s10
  $region7: #{large_baseline_graphsage_cluster_forward.1} parent=0 // loop_footer_branch
    %9 = sbr.rel target = $region3
  $region8: #{large_baseline_graphsage_cluster_forward.1} parent=0 // loop_exit
    _

</llo_original>
